<compile_context>
chip_gen: v7x
topology: tpu7x:2x2x1
jax: 0.10.0
libtpu: 0.0.40
codegen_flags: <defaults>
</compile_context>

<pallas_src>
import functools

import numpy as np
import jax
import jax.numpy as jnp
from jax.experimental import pallas as pl
from jax.experimental.pallas import tpu as pltpu

# ----------------------------- FSQ constants (static) -----------------------
LEVELS = [5, 5, 5, 8, 8]
EPS = 1e-3
D = len(LEVELS)
LANE = 128
TM_MAX = 512


def _round_up(x, m):
    return (x + m - 1) // m * m


def _fsq_const_table(n_pad):
    """Rows: [half_l, offset, shift, half_width, basis], padded to n_pad cols."""
    lv = np.asarray(LEVELS, np.float32)
    half_l = (lv - 1.0) * (1.0 - EPS) / 2.0
    offset = np.where(lv % 2 == 1, 0.0, 0.5).astype(np.float32)
    shift = np.tan(offset / half_l).astype(np.float32)
    half_w = (np.asarray(LEVELS) // 2).astype(np.float32)
    basis = np.concatenate([[1.0], np.cumprod(lv[:-1])]).astype(np.float32)

    tbl = np.zeros((5, n_pad), np.float32)
    tbl[0, :] = 1.0   # half_l pad (harmless: tanh(0)*1-0 = 0)
    tbl[3, :] = 1.0   # half_width pad (avoid /0 on padded columns)
    tbl[0, :D] = half_l
    tbl[1, :D] = offset
    tbl[2, :D] = shift
    tbl[3, :D] = half_w
    tbl[4, :D] = basis    # basis pad stays 0 -> padded cols never touch idx
    return tbl


# ----------------------------- Pallas kernels --------------------------------
def _mm_bias_kernel(x_ref, w_ref, b_ref, o_ref, *, relu):
    """(TM,K)@(K,Npad) bf16 inputs, f32 accumulate, +bias, optional ReLU."""
    acc = jnp.dot(x_ref[...], w_ref[...], preferred_element_type=jnp.float32)
    acc = acc + b_ref[...]
    if relu:
        acc = jnp.maximum(acc, 0.0)
    o_ref[...] = acc


def _mm_fsq_kernel(x_ref, w_ref, b_ref, c_ref, q_ref, idx_ref):
    """Fused encoder-head matmul + FSQ quantize + codes_to_indexes."""
    z = jnp.dot(x_ref[...], w_ref[...], preferred_element_type=jnp.float32)
    z = z + b_ref[...]

    c = c_ref[...]                     # (5, Npad) constants, passed as input
    half_l = c[0:1, :]
    offset = c[1:2, :]
    shift = c[2:3, :]
    half_w = c[3:4, :]
    basis = c[4:5, :]

    bounded = jnp.tanh(z + shift) * half_l - offset     # FSQ.bound
    zhat = jnp.round(bounded)                           # round_ste (fwd value)
    q_ref[...] = zhat / half_w                          # FSQ.quantize
    scaled = zhat + half_w                              # _scale_and_shift(q)
    idx = jnp.sum(scaled * basis, axis=-1, keepdims=True)
    idx_ref[...] = idx.astype(jnp.int32)                # codes_to_indexes


# ----------------------------- pallas_call wrappers ---------------------------
def _pad_operands(x, w, b):
    M, K = x.shape
    N = w.shape[1]
    n_pad = _round_up(N, LANE)
    tm = min(TM_MAX, _round_up(max(M, 1), 16))          # bf16 sublane pack = 16
    m_pad = _round_up(M, tm)

    x_p = jnp.zeros((m_pad, K), jnp.bfloat16).at[:M, :].set(x.astype(jnp.bfloat16))
    w_p = jnp.zeros((K, n_pad), jnp.bfloat16).at[:, :N].set(w.astype(jnp.bfloat16))
    b_p = jnp.zeros((1, n_pad), jnp.float32).at[0, :N].set(b.astype(jnp.float32))
    return x_p, w_p, b_p, (M, K, N, m_pad, n_pad, tm)


def matmul_bias(x, w, b, relu=False):
    x_p, w_p, b_p, (M, K, N, m_pad, n_pad, tm) = _pad_operands(x, w, b)
    out = pl.pallas_call(
        functools.partial(_mm_bias_kernel, relu=relu),
        out_shape=jax.ShapeDtypeStruct((m_pad, n_pad), jnp.float32),
        grid=(m_pad // tm,),
        in_specs=[
            pl.BlockSpec((tm, K), lambda i: (i, 0)),
            pl.BlockSpec((K, n_pad), lambda i: (0, 0)),
            pl.BlockSpec((1, n_pad), lambda i: (0, 0)),
        ],
        out_specs=pl.BlockSpec((tm, n_pad), lambda i: (i, 0)),
        compiler_params=pltpu.CompilerParams(dimension_semantics=("parallel",)),
    )(x_p, w_p, b_p)
    return out[:M, :N]


def matmul_bias_fsq(x, w, b):
    """Fused (im2col @ W + b) -> FSQ.  Returns (quantized (M,D), indices (M,))."""
    x_p, w_p, b_p, (M, K, N, m_pad, n_pad, tm) = _pad_operands(x, w, b)
    consts = jnp.asarray(_fsq_const_table(n_pad))   # kernel INPUT, not capture

    q, idx = pl.pallas_call(
        _mm_fsq_kernel,
        out_shape=(
            jax.ShapeDtypeStruct((m_pad, n_pad), jnp.float32),
            jax.ShapeDtypeStruct((m_pad, 1), jnp.int32),
        ),
        grid=(m_pad // tm,),
        in_specs=[
            pl.BlockSpec((tm, K), lambda i: (i, 0)),
            pl.BlockSpec((K, n_pad), lambda i: (0, 0)),
            pl.BlockSpec((1, n_pad), lambda i: (0, 0)),
            pl.BlockSpec((5, n_pad), lambda i: (0, 0)),
        ],
        out_specs=(
            pl.BlockSpec((tm, n_pad), lambda i: (i, 0)),
            pl.BlockSpec((tm, 1), lambda i: (i, 0)),
        ),
        compiler_params=pltpu.CompilerParams(dimension_semantics=("parallel",)),
    )(x_p, w_p, b_p, consts)
    return q[:M, :N], idx[:M, 0]


# ----------------------------- conv glue (plain JAX) -------------------------
def _im2col(x, k, stride, pad):
    """x: NHWC -> (B*Ho*Wo, k*k*C) with (di, dj, c) ordering, c fastest."""
    B, H, W, C = x.shape
    xp = jnp.pad(x, ((0, 0), (pad, pad), (pad, pad), (0, 0)))
    Ho = (H + 2 * pad - k) // stride + 1
    Wo = (W + 2 * pad - k) // stride + 1
    cols = []
    for di in range(k):
        for dj in range(k):
            cols.append(
                xp[:, di:di + (Ho - 1) * stride + 1:stride,
                      dj:dj + (Wo - 1) * stride + 1:stride, :])
    cols = jnp.concatenate(cols, axis=-1)            # (B, Ho, Wo, k*k*C)
    return cols.reshape(B * Ho * Wo, k * k * C), (B, Ho, Wo)


def conv2d(x, w, b, stride, pad, relu=False):
    """x: NHWC ; w: (Cout, Cin, kh, kw) PyTorch Conv2d layout."""
    Cout, Cin, kh, kw = w.shape
    cols, (B, Ho, Wo) = _im2col(x, kh, stride, pad)
    w_mat = jnp.transpose(w, (2, 3, 1, 0)).reshape(kh * kw * Cin, Cout)
    out = matmul_bias(cols, w_mat, b, relu=relu)
    return out.reshape(B, Ho, Wo, Cout)


def conv2d_fsq(x, w, b, stride, pad):
    """Encoder head conv fused with the FSQ quantizer."""
    Cout, Cin, kh, kw = w.shape
    cols, (B, Ho, Wo) = _im2col(x, kh, stride, pad)
    w_mat = jnp.transpose(w, (2, 3, 1, 0)).reshape(kh * kw * Cin, Cout)
    q, idx = matmul_bias_fsq(cols, w_mat, b)
    return q.reshape(B, Ho, Wo, Cout), idx.reshape(B, Ho, Wo)


def _convT_subpixel_weight(w):
    """Fold ConvT(k=4,s=2,p=1) weights into a (9*Cin, 4*Cout) subpixel matrix.

    out[2p+r, 2q+s] = sum_{di,dj} x[p-1+di, q-1+dj] * w[:, :, r+3-2di, s+3-2dj]
    Built with a constant numpy gather map (an extra zero plane at kernel
    index 4 absorbs out-of-range taps) -> constant-folded under jit.
    """
    Cin, Cout, _, _ = w.shape
    w_pad = jnp.pad(w, ((0, 0), (0, 0), (0, 1), (0, 1)))       # (Cin,Cout,5,5)
    kmap = np.full((3, 2), 4, np.int32)                        # [di, r] -> tap
    for di in range(3):
        for r in range(2):
            t = r + 3 - 2 * di
            if 0 <= t < 4:
                kmap[di, r] = t
    kh_idx = kmap[:, None, :, None]                            # (3,1,2,1)
    kw_idx = kmap[None, :, None, :]                            # (1,3,1,2)
    w_eff = w_pad[:, :, kh_idx, kw_idx]                        # (Cin,Cout,3,3,2,2)
    w_mat = jnp.transpose(w_eff, (2, 3, 0, 4, 5, 1)).reshape(9 * Cin, 4 * Cout)
    return w_mat


def conv_transpose2d_s2(x, w, b, relu=False):
    """nn.ConvTranspose2d(kernel=4, stride=2, padding=1), subpixel decomposition.

    x: NHWC ; w: (Cin, Cout, 4, 4) PyTorch ConvTranspose2d layout.
    One 3x3/stride-1 im2col over the input, one matmul with N = 4*Cout (the
    four sub-pixel heads concatenated), then depth-to-space.
    """
    B, H, W, Cin = x.shape
    Cin_w, Cout, kh, kw = w.shape
    assert Cin_w == Cin and kh == 4 and kw == 4

    w_mat = _convT_subpixel_weight(w)                    # (9*Cin, 4*Cout)
    b_eff = jnp.tile(b, 4)                               # (r,s) slow, Cout fast

    cols, (_, Ho, Wo) = _im2col(x, 3, stride=1, pad=1)   # Ho=H, Wo=W
    out = matmul_bias(cols, w_mat, b_eff, relu=relu)     # (B*H*W, 4*Cout)
    out = out.reshape(B, H, W, 2, 2, Cout)
    out = jnp.transpose(out, (0, 1, 3, 2, 4, 5)).reshape(B, 2 * H, 2 * W, Cout)
    return out


# ----------------------------- model ----------------------------------------
def init_params(key, cin=4, hidden=32):
    ks = jax.random.split(key, 8)

    def w(k, shape, fan_in):
        return jax.random.normal(k, shape, jnp.float32) / np.sqrt(float(fan_in))

    return {
        # Encoder (Conv2d weights: (Cout, Cin, kh, kw))
        "enc_w1": w(ks[0], (hidden, cin, 3, 3), cin * 9),
        "enc_b1": 0.01 * jax.random.normal(ks[1], (hidden,), jnp.float32),
        "enc_w2": w(ks[2], (D, hidden, 3, 3), hidden * 9),
        "enc_b2": 0.01 * jax.random.normal(ks[3], (D,), jnp.float32),
        # Decoder (ConvTranspose2d weights: (Cin, Cout, kh, kw))
        "dec_w1": w(ks[4], (D, hidden, 4, 4), D * 16),
        "dec_b1": 0.01 * jax.random.normal(ks[5], (hidden,), jnp.float32),
        "dec_w2": w(ks[6], (hidden, cin, 4, 4), hidden * 16),
        "dec_b2": 0.01 * jax.random.normal(ks[7], (cin,), jnp.float32),
    }


def fsqvae_forward(params, x_nchw):
    """FSQVAE.forward: returns (reconstruction NCHW, int32 code indices)."""
    x = jnp.transpose(x_nchw, (0, 2, 3, 1)).astype(jnp.float32)   # -> NHWC

    # Encoder
    h = conv2d(x, params["enc_w1"], params["enc_b1"], stride=2, pad=1, relu=True)
    # Encoder head + FSQ quantizer fused in one Pallas kernel
    quantized, indices = conv2d_fsq(h, params["enc_w2"], params["enc_b2"],
                                    stride=2, pad=1)

    # Decoder (subpixel conv-transpose, no zero-dilation)
    h = conv_transpose2d_s2(quantized, params["dec_w1"], params["dec_b1"], relu=True)
    xr = conv_transpose2d_s2(h, params["dec_w2"], params["dec_b2"], relu=False)
    return jnp.transpose(xr, (0, 3, 1, 2)), indices               # -> NCHW


if __name__ == "__main__":
    key = jax.random.PRNGKey(0)
    kx, kp = jax.random.split(key)
    x = jax.random.normal(kx, (2, 4, 16, 16), jnp.float32)        # NCHW input
    params = init_params(kp, cin=4, hidden=32)

    fwd = jax.jit(functools.partial(fsqvae_forward, params))
    recon, indices = fwd(x)
    jax.block_until_ready((recon, indices))

    assert recon.shape == (2, 4, 16, 16) and recon.dtype == jnp.float32
    assert indices.shape == (2, 4, 4) and indices.dtype == jnp.int32
    assert bool(jnp.all(jnp.isfinite(recon)))
    assert int(jnp.max(indices)) < int(np.prod(LEVELS)) and int(jnp.min(indices)) >= 0
    print("KERNEL_OK")
</pallas_src>

<mosaic_0001>
module attributes {stable_mosaic.version = 11 : i64} {
  func.func @_mm_bias_kernel(%arg0: i32, %arg1: memref<128x36xbf16, #tpu.memory_space<vmem>>, %arg2: memref<36x128xbf16, #tpu.memory_space<vmem>>, %arg3: memref<1x128xf32, #tpu.memory_space<vmem>>, %arg4: memref<128x128xf32, #tpu.memory_space<vmem>>) attributes {dimension_semantics = [#tpu.dimension_semantics<parallel>], iteration_bounds = array<i64: 1>, scalar_prefetch = 0 : i64, scratch_operands = 0 : i64, tpu.core_type = #tpu.core_type<tc>, window_params = [{transform_indices = @transform_0, window_bounds = array<i64: 128, 36>}, {pipeline_mode = #tpu.pipeline_mode<synchronous>, transform_indices = @transform_1, window_bounds = array<i64: 36, 128>}, {pipeline_mode = #tpu.pipeline_mode<synchronous>, transform_indices = @transform_2, window_bounds = array<i64: 1, 128>}, {transform_indices = @transform_3, window_bounds = array<i64: 128, 128>}]} {
    %c0 = arith.constant 0 : index
    %c0_0 = arith.constant 0 : index
    %0 = vector.load %arg1[%c0, %c0_0] : memref<128x36xbf16, #tpu.memory_space<vmem>>, vector<128x36xbf16>
    %c0_1 = arith.constant 0 : index
    %c0_2 = arith.constant 0 : index
    %1 = vector.load %arg2[%c0_1, %c0_2] : memref<36x128xbf16, #tpu.memory_space<vmem>>, vector<36x128xbf16>
    %cst = arith.constant dense<0.000000e+00> : vector<128x128xf32>
    %2 = tpu.matmul %0, %1, %cst {dimension_numbers = #tpu.dot_dimension_numbers<[1], [0], [0], [1], [0, 0, 1, 1], [], []>} : vector<128x36xbf16>, vector<36x128xbf16>, vector<128x128xf32> -> vector<128x128xf32>
    %c0_3 = arith.constant 0 : index
    %c0_4 = arith.constant 0 : index
    %3 = vector.load %arg3[%c0_3, %c0_4] : memref<1x128xf32, #tpu.memory_space<vmem>>, vector<1x128xf32>
    %4 = vector.broadcast %3 : vector<1x128xf32> to vector<128x128xf32>
    %5 = arith.addf %2, %4 : vector<128x128xf32>
    %cst_5 = arith.constant 0.000000e+00 : f32
    %6 = vector.broadcast %cst_5 : f32 to vector<128x128xf32>
    %7 = arith.maximumf %5, %6 : vector<128x128xf32>
    %c0_6 = arith.constant 0 : index
    %c0_7 = arith.constant 0 : index
    %8 = vector.load %arg4[%c0_6, %c0_7] : memref<128x128xf32, #tpu.memory_space<vmem>>, vector<128x128xf32>
    tpu.vector_store %arg4[%c0_6, %c0_7], %7 {strides = array<i32>} : memref<128x128xf32, #tpu.memory_space<vmem>>, vector<128x128xf32>,
    return
  }
  func.func @transform_0(%arg0: i32) -> (i32, i32) {
    %c0_i32 = arith.constant 0 : i32
    %c0_i32_0 = arith.constant 0 : i32
    return %arg0, %c0_i32 : i32, i32
  }
  func.func @transform_1(%arg0: i32) -> (i32, i32) {
    %c0_i32 = arith.constant 0 : i32
    %c0_i32_0 = arith.constant 0 : i32
    %c0_i32_1 = arith.constant 0 : i32
    return %c0_i32, %c0_i32_0 : i32, i32
  }
  func.func @transform_2(%arg0: i32) -> (i32, i32) {
    %c0_i32 = arith.constant 0 : i32
    %c0_i32_0 = arith.constant 0 : i32
    %c0_i32_1 = arith.constant 0 : i32
    return %c0_i32, %c0_i32_0 : i32, i32
  }
  func.func @transform_3(%arg0: i32) -> (i32, i32) {
    %c0_i32 = arith.constant 0 : i32
    %c0_i32_0 = arith.constant 0 : i32
    return %arg0, %c0_i32 : i32, i32
  }
}

module attributes {stable_mosaic.version = 11 : i64} {
  func.func @_mm_fsq_kernel(%arg0: i32, %arg1: memref<32x288xbf16, #tpu.memory_space<vmem>>, %arg2: memref<288x128xbf16, #tpu.memory_space<vmem>>, %arg3: memref<1x128xf32, #tpu.memory_space<vmem>>, %arg4: memref<5x128xf32, #tpu.memory_space<vmem>>, %arg5: memref<32x128xf32, #tpu.memory_space<vmem>>, %arg6: memref<32x1xi32, #tpu.memory_space<vmem>>) attributes {dimension_semantics = [#tpu.dimension_semantics<parallel>], iteration_bounds = array<i64: 1>, scalar_prefetch = 0 : i64, scratch_operands = 0 : i64, tpu.core_type = #tpu.core_type<tc>, window_params = [{transform_indices = @transform_0, window_bounds = array<i64: 32, 288>}, {pipeline_mode = #tpu.pipeline_mode<synchronous>, transform_indices = @transform_1, window_bounds = array<i64: 288, 128>}, {pipeline_mode = #tpu.pipeline_mode<synchronous>, transform_indices = @transform_2, window_bounds = array<i64: 1, 128>}, {pipeline_mode = #tpu.pipeline_mode<synchronous>, transform_indices = @transform_3, window_bounds = array<i64: 5, 128>}, {transform_indices = @transform_4, window_bounds = array<i64: 32, 128>}, {transform_indices = @transform_5, window_bounds = array<i64: 32, 1>}]} {
    %c0 = arith.constant 0 : index
    %c0_0 = arith.constant 0 : index
    %0 = vector.load %arg1[%c0, %c0_0] : memref<32x288xbf16, #tpu.memory_space<vmem>>, vector<32x288xbf16>
    %c0_1 = arith.constant 0 : index
    %c0_2 = arith.constant 0 : index
    %1 = vector.load %arg2[%c0_1, %c0_2] : memref<288x128xbf16, #tpu.memory_space<vmem>>, vector<288x128xbf16>
    %cst = arith.constant dense<0.000000e+00> : vector<32x128xf32>
    %2 = tpu.matmul %0, %1, %cst {dimension_numbers = #tpu.dot_dimension_numbers<[1], [0], [0], [1], [0, 0, 1, 1], [], []>} : vector<32x288xbf16>, vector<288x128xbf16>, vector<32x128xf32> -> vector<32x128xf32>
    %c0_3 = arith.constant 0 : index
    %c0_4 = arith.constant 0 : index
    %3 = vector.load %arg3[%c0_3, %c0_4] : memref<1x128xf32, #tpu.memory_space<vmem>>, vector<1x128xf32>
    %4 = vector.broadcast %3 : vector<1x128xf32> to vector<32x128xf32>
    %5 = arith.addf %2, %4 : vector<32x128xf32>
    %c0_5 = arith.constant 0 : index
    %c0_6 = arith.constant 0 : index
    %6 = vector.load %arg4[%c0_5, %c0_6] : memref<5x128xf32, #tpu.memory_space<vmem>>, vector<5x128xf32>
    %7 = vector.extract_strided_slice %6 {offsets = [0, 0], sizes = [1, 128], strides = [1, 1]} : vector<5x128xf32> to vector<1x128xf32>
    %8 = vector.extract_strided_slice %6 {offsets = [1, 0], sizes = [1, 128], strides = [1, 1]} : vector<5x128xf32> to vector<1x128xf32>
    %9 = vector.extract_strided_slice %6 {offsets = [2, 0], sizes = [1, 128], strides = [1, 1]} : vector<5x128xf32> to vector<1x128xf32>
    %10 = vector.extract_strided_slice %6 {offsets = [3, 0], sizes = [1, 128], strides = [1, 1]} : vector<5x128xf32> to vector<1x128xf32>
    %11 = vector.extract_strided_slice %6 {offsets = [4, 0], sizes = [1, 128], strides = [1, 1]} : vector<5x128xf32> to vector<1x128xf32>
    %12 = vector.broadcast %9 : vector<1x128xf32> to vector<32x128xf32>
    %13 = arith.addf %5, %12 : vector<32x128xf32>
    %14 = math.tanh %13 : vector<32x128xf32>
    %15 = vector.broadcast %7 : vector<1x128xf32> to vector<32x128xf32>
    %16 = arith.mulf %14, %15 : vector<32x128xf32>
    %17 = vector.broadcast %8 : vector<1x128xf32> to vector<32x128xf32>
    %18 = arith.subf %16, %17 : vector<32x128xf32>
    %19 = math.roundeven %18 : vector<32x128xf32>
    %20 = vector.broadcast %10 : vector<1x128xf32> to vector<32x128xf32>
    %21 = arith.divf %19, %20 : vector<32x128xf32>
    %c0_7 = arith.constant 0 : index
    %c0_8 = arith.constant 0 : index
    %22 = vector.load %arg5[%c0_7, %c0_8] : memref<32x128xf32, #tpu.memory_space<vmem>>, vector<32x128xf32>
    tpu.vector_store %arg5[%c0_7, %c0_8], %21 {strides = array<i32>} : memref<32x128xf32, #tpu.memory_space<vmem>>, vector<32x128xf32>,
    %23 = vector.broadcast %10 : vector<1x128xf32> to vector<32x128xf32>
    %24 = arith.addf %19, %23 : vector<32x128xf32>
    %25 = vector.broadcast %11 : vector<1x128xf32> to vector<32x128xf32>
    %26 = arith.mulf %24, %25 : vector<32x128xf32>
    %cst_9 = arith.constant dense<0.000000e+00> : vector<32xf32>
    %27 = vector.multi_reduction <add>, %26, %cst_9 [1] : vector<32x128xf32> to vector<32xf32>
    %28 = vector.shape_cast %27 : vector<32xf32> to vector<32x1xf32>
    %29 = arith.fptosi %28 : vector<32x1xf32> to vector<32x1xi32>
    %c0_10 = arith.constant 0 : index
    %c0_11 = arith.constant 0 : index
    %30 = vector.load %arg6[%c0_10, %c0_11] : memref<32x1xi32, #tpu.memory_space<vmem>>, vector<32x1xi32>
    tpu.vector_store %arg6[%c0_10, %c0_11], %29 {strides = array<i32>} : memref<32x1xi32, #tpu.memory_space<vmem>>, vector<32x1xi32>,
    return
  }
  func.func @transform_0(%arg0: i32) -> (i32, i32) {
    %c0_i32 = arith.constant 0 : i32
    %c0_i32_0 = arith.constant 0 : i32
    return %arg0, %c0_i32 : i32, i32
  }
  func.func @transform_1(%arg0: i32) -> (i32, i32) {
    %c0_i32 = arith.constant 0 : i32
    %c0_i32_0 = arith.constant 0 : i32
    %c0_i32_1 = arith.constant 0 : i32
    return %c0_i32, %c0_i32_0 : i32, i32
  }
  func.func @transform_2(%arg0: i32) -> (i32, i32) {
    %c0_i32 = arith.constant 0 : i32
    %c0_i32_0 = arith.constant 0 : i32
    %c0_i32_1 = arith.constant 0 : i32
    return %c0_i32, %c0_i32_0 : i32, i32
  }
  func.func @transform_3(%arg0: i32) -> (i32, i32) {
    %c0_i32 = arith.constant 0 : i32
    %c0_i32_0 = arith.constant 0 : i32
    %c0_i32_1 = arith.constant 0 : i32
    return %c0_i32, %c0_i32_0 : i32, i32
  }
  func.func @transform_4(%arg0: i32) -> (i32, i32) {
    %c0_i32 = arith.constant 0 : i32
    %c0_i32_0 = arith.constant 0 : i32
    return %arg0, %c0_i32 : i32, i32
  }
  func.func @transform_5(%arg0: i32) -> (i32, i32) {
    %c0_i32 = arith.constant 0 : i32
    %c0_i32_0 = arith.constant 0 : i32
    return %arg0, %c0_i32 : i32, i32
  }
}

module attributes {stable_mosaic.version = 11 : i64} {
  func.func @_mm_bias_kernel(%arg0: i32, %arg1: memref<32x45xbf16, #tpu.memory_space<vmem>>, %arg2: memref<45x128xbf16, #tpu.memory_space<vmem>>, %arg3: memref<1x128xf32, #tpu.memory_space<vmem>>, %arg4: memref<32x128xf32, #tpu.memory_space<vmem>>) attributes {dimension_semantics = [#tpu.dimension_semantics<parallel>], iteration_bounds = array<i64: 1>, scalar_prefetch = 0 : i64, scratch_operands = 0 : i64, tpu.core_type = #tpu.core_type<tc>, window_params = [{transform_indices = @transform_0, window_bounds = array<i64: 32, 45>}, {pipeline_mode = #tpu.pipeline_mode<synchronous>, transform_indices = @transform_1, window_bounds = array<i64: 45, 128>}, {pipeline_mode = #tpu.pipeline_mode<synchronous>, transform_indices = @transform_2, window_bounds = array<i64: 1, 128>}, {transform_indices = @transform_3, window_bounds = array<i64: 32, 128>}]} {
    %c0 = arith.constant 0 : index
    %c0_0 = arith.constant 0 : index
    %0 = vector.load %arg1[%c0, %c0_0] : memref<32x45xbf16, #tpu.memory_space<vmem>>, vector<32x45xbf16>
    %c0_1 = arith.constant 0 : index
    %c0_2 = arith.constant 0 : index
    %1 = vector.load %arg2[%c0_1, %c0_2] : memref<45x128xbf16, #tpu.memory_space<vmem>>, vector<45x128xbf16>
    %cst = arith.constant dense<0.000000e+00> : vector<32x128xf32>
    %2 = tpu.matmul %0, %1, %cst {dimension_numbers = #tpu.dot_dimension_numbers<[1], [0], [0], [1], [0, 0, 1, 1], [], []>} : vector<32x45xbf16>, vector<45x128xbf16>, vector<32x128xf32> -> vector<32x128xf32>
    %c0_3 = arith.constant 0 : index
    %c0_4 = arith.constant 0 : index
    %3 = vector.load %arg3[%c0_3, %c0_4] : memref<1x128xf32, #tpu.memory_space<vmem>>, vector<1x128xf32>
    %4 = vector.broadcast %3 : vector<1x128xf32> to vector<32x128xf32>
    %5 = arith.addf %2, %4 : vector<32x128xf32>
    %cst_5 = arith.constant 0.000000e+00 : f32
    %6 = vector.broadcast %cst_5 : f32 to vector<32x128xf32>
    %7 = arith.maximumf %5, %6 : vector<32x128xf32>
    %c0_6 = arith.constant 0 : index
    %c0_7 = arith.constant 0 : index
    %8 = vector.load %arg4[%c0_6, %c0_7] : memref<32x128xf32, #tpu.memory_space<vmem>>, vector<32x128xf32>
    tpu.vector_store %arg4[%c0_6, %c0_7], %7 {strides = array<i32>} : memref<32x128xf32, #tpu.memory_space<vmem>>, vector<32x128xf32>,
    return
  }
  func.func @transform_0(%arg0: i32) -> (i32, i32) {
    %c0_i32 = arith.constant 0 : i32
    %c0_i32_0 = arith.constant 0 : i32
    return %arg0, %c0_i32 : i32, i32
  }
  func.func @transform_1(%arg0: i32) -> (i32, i32) {
    %c0_i32 = arith.constant 0 : i32
    %c0_i32_0 = arith.constant 0 : i32
    %c0_i32_1 = arith.constant 0 : i32
    return %c0_i32, %c0_i32_0 : i32, i32
  }
  func.func @transform_2(%arg0: i32) -> (i32, i32) {
    %c0_i32 = arith.constant 0 : i32
    %c0_i32_0 = arith.constant 0 : i32
    %c0_i32_1 = arith.constant 0 : i32
    return %c0_i32, %c0_i32_0 : i32, i32
  }
  func.func @transform_3(%arg0: i32) -> (i32, i32) {
    %c0_i32 = arith.constant 0 : i32
    %c0_i32_0 = arith.constant 0 : i32
    return %arg0, %c0_i32 : i32, i32
  }
}

module attributes {stable_mosaic.version = 11 : i64} {
  func.func @_mm_bias_kernel(%arg0: i32, %arg1: memref<128x288xbf16, #tpu.memory_space<vmem>>, %arg2: memref<288x128xbf16, #tpu.memory_space<vmem>>, %arg3: memref<1x128xf32, #tpu.memory_space<vmem>>, %arg4: memref<128x128xf32, #tpu.memory_space<vmem>>) attributes {dimension_semantics = [#tpu.dimension_semantics<parallel>], iteration_bounds = array<i64: 1>, scalar_prefetch = 0 : i64, scratch_operands = 0 : i64, tpu.core_type = #tpu.core_type<tc>, window_params = [{transform_indices = @transform_0, window_bounds = array<i64: 128, 288>}, {pipeline_mode = #tpu.pipeline_mode<synchronous>, transform_indices = @transform_1, window_bounds = array<i64: 288, 128>}, {pipeline_mode = #tpu.pipeline_mode<synchronous>, transform_indices = @transform_2, window_bounds = array<i64: 1, 128>}, {transform_indices = @transform_3, window_bounds = array<i64: 128, 128>}]} {
    %c0 = arith.constant 0 : index
    %c0_0 = arith.constant 0 : index
    %0 = vector.load %arg1[%c0, %c0_0] : memref<128x288xbf16, #tpu.memory_space<vmem>>, vector<128x288xbf16>
    %c0_1 = arith.constant 0 : index
    %c0_2 = arith.constant 0 : index
    %1 = vector.load %arg2[%c0_1, %c0_2] : memref<288x128xbf16, #tpu.memory_space<vmem>>, vector<288x128xbf16>
    %cst = arith.constant dense<0.000000e+00> : vector<128x128xf32>
    %2 = tpu.matmul %0, %1, %cst {dimension_numbers = #tpu.dot_dimension_numbers<[1], [0], [0], [1], [0, 0, 1, 1], [], []>} : vector<128x288xbf16>, vector<288x128xbf16>, vector<128x128xf32> -> vector<128x128xf32>
    %c0_3 = arith.constant 0 : index
    %c0_4 = arith.constant 0 : index
    %3 = vector.load %arg3[%c0_3, %c0_4] : memref<1x128xf32, #tpu.memory_space<vmem>>, vector<1x128xf32>
    %4 = vector.broadcast %3 : vector<1x128xf32> to vector<128x128xf32>
    %5 = arith.addf %2, %4 : vector<128x128xf32>
    %c0_5 = arith.constant 0 : index
    %c0_6 = arith.constant 0 : index
    %6 = vector.load %arg4[%c0_5, %c0_6] : memref<128x128xf32, #tpu.memory_space<vmem>>, vector<128x128xf32>
    tpu.vector_store %arg4[%c0_5, %c0_6], %5 {strides = array<i32>} : memref<128x128xf32, #tpu.memory_space<vmem>>, vector<128x128xf32>,
    return
  }
  func.func @transform_0(%arg0: i32) -> (i32, i32) {
    %c0_i32 = arith.constant 0 : i32
    %c0_i32_0 = arith.constant 0 : i32
    return %arg0, %c0_i32 : i32, i32
  }
  func.func @transform_1(%arg0: i32) -> (i32, i32) {
    %c0_i32 = arith.constant 0 : i32
    %c0_i32_0 = arith.constant 0 : i32
    %c0_i32_1 = arith.constant 0 : i32
    return %c0_i32, %c0_i32_0 : i32, i32
  }
  func.func @transform_2(%arg0: i32) -> (i32, i32) {
    %c0_i32 = arith.constant 0 : i32
    %c0_i32_0 = arith.constant 0 : i32
    %c0_i32_1 = arith.constant 0 : i32
    return %c0_i32, %c0_i32_0 : i32, i32
  }
  func.func @transform_3(%arg0: i32) -> (i32, i32) {
    %c0_i32 = arith.constant 0 : i32
    %c0_i32_0 = arith.constant 0 : i32
    return %arg0, %c0_i32 : i32, i32
  }
}

</mosaic_0001>

<llo_original>
// kernel: fsqvae_forward.4
$region0: #{fsqvae_forward.4}
  #allocation0 [shape = 'u32[]', space=smem, size = 0x4, offset = 0x4, fixed_abs, tag = 'smem constant byte address 0x4 - core index']
  #allocation1 [shape = 'u32[144,128]{1,0:T(1,128)}', space=vmem, size = 0x12000, scoped, tag = 'internal scratch']
  %s0 = inlined_call_operand.vmem [shape: bf16[128,36], index: 0, kind: input, shape index: {}]
  %s1 = inlined_call_operand.vmem [shape: bf16[36,128], index: 1, kind: input, shape index: {}]
  %s2 = inlined_call_operand.vmem [shape: f32[1,128], index: 2, kind: input, shape index: {}]
  %s3 = inlined_call_operand.vmem [shape: f32[128,128], index: 3, kind: output, shape index: {}]
  %s4 = sld [smem:[#allocation0]]
  $region22: #{fsqvae_forward.4} parent=0
    _
  %s6 = ssub.s32 1, %s4
  %s7 = scalar_select 0, %s6, %s4
  // Predicated region
  $region2: #{fsqvae_forward.4} parent=0 // pred_check
    _
  $region3: #{fsqvae_forward.4} parent=0 // pred_check_branch
    %9 = sbr.rel (0) target = $region5
  $region4: #{fsqvae_forward.4} parent=0 // pred_region
    _
  $region5: #{fsqvae_forward.4} parent=0 // pred_fallthru
    _
  // Predicated region
  $region6: #{fsqvae_forward.4} parent=0 // pred_check
    _
  $region7: #{fsqvae_forward.4} parent=0 // pred_check_branch
    %11 = sbr.rel (0) target = $region9
  $region8: #{fsqvae_forward.4} parent=0 // pred_region
    _
  $region9: #{fsqvae_forward.4} parent=0 // pred_fallthru
    _
  // Predicated region
  $region10: #{fsqvae_forward.4} parent=0 // pred_check
    _
  $region11: #{fsqvae_forward.4} parent=0 // pred_check_branch
    %13 = sbr.rel (0) target = $region13
  $region12: #{fsqvae_forward.4} parent=0 // pred_region
    _
  $region13: #{fsqvae_forward.4} parent=0 // pred_fallthru
    _
  %v15 = vld [vmem:[%s0] sm:$0xf]
  %v16 = vld [vmem:[%s0 + $0x4] sm:$0xf]
  %v17 = vld [vmem:[%s0 + $0x8] sm:$0xf]
  %v18 = vld [vmem:[%s0 + $0xc] sm:$0xf]
  %v19 = vld [vmem:[%s0 + $0x10] sm:$0xf]
  %v20 = vld [vmem:[%s0 + $0x14] sm:$0xf]
  %v21 = vld [vmem:[%s0 + $0x18] sm:$0xf]
  %v22 = vld [vmem:[%s0 + $0x1c] sm:$0xf]
  %v23 = vld [vmem:[%s0 + $0x20] sm:$0xf]
  %v24 = vld [vmem:[%s0 + $0x24] sm:$0xf]
  %v25 = vld [vmem:[%s0 + $0x28] sm:$0xf]
  %v26 = vld [vmem:[%s0 + $0x2c] sm:$0xf]
  %v27 = vld [vmem:[%s0 + $0x30] sm:$0xf]
  %v28 = vld [vmem:[%s0 + $0x34] sm:$0xf]
  %v29 = vld [vmem:[%s0 + $0x38] sm:$0xf]
  %v30 = vld [vmem:[%s0 + $0x3c] sm:$0xf]
  %v31 = vld [vmem:[%s1] sm:$0xf]
  %v32 = vld [vmem:[%s1 + $0x4] sm:$0xf]
  %v33 = vld [vmem:[%s1 + $0x8] sm:$0xf]
  %v34 = vld [vmem:[%s1 + $0xc] sm:$0xf]
  %v35 = vld [vmem:[%s1 + $0x10] sm:$0x3]
  %v36 = vld [vmem:[%s2] sm:$0x1]
  %v38 = vlaneseq
  %v39 = vshrl.u32 %v38, 7
  %v40 = vsub.s32 0, %v39
  %v41 = vrot.slane %v36, %v40
  %v59 = vunpack.c.l.b16 %v15
  %v60 = vunpack.c.l.b16 %v16
  %v61 = vunpack.c.l.b16 %v17
  %v62 = vunpack.c.l.b16 %v18
  %v63 = vunpack.c.l.b16 %v19
  %v64 = vunpack.c.l.b16 %v20
  %v65 = vunpack.c.l.b16 %v21
  %v66 = vunpack.c.l.b16 %v22
  %v67 = vunpack.c.l.b16 %v23
  %v68 = vunpack.c.l.b16 %v24
  %v69 = vunpack.c.l.b16 %v25
  %v70 = vunpack.c.l.b16 %v26
  %v71 = vunpack.c.l.b16 %v27
  %v72 = vunpack.c.l.b16 %v28
  %v73 = vunpack.c.l.b16 %v29
  %v74 = vunpack.c.l.b16 %v30
  %v75 = vpack.c.b16 %v60, %v59
  %v76 = vpack.c.b16 %v62, %v61
  %v77 = vpack.c.b16 %v64, %v63
  %v78 = vpack.c.b16 %v66, %v65
  %v79 = vpack.c.b16 %v68, %v67
  %v80 = vpack.c.b16 %v70, %v69
  %v81 = vpack.c.b16 %v72, %v71
  %v82 = vpack.c.b16 %v74, %v73
  %v88 = vunpack.c.l.b16 %v31
  %v89 = vunpack.c.l.b16 %v32
  %v90 = vunpack.c.l.b16 %v33
  %v91 = vunpack.c.l.b16 %v34
  %v92 = vunpack.c.l.b16 %v35
  %v93 = vpack.c.b16 %v89, %v88
  %v94 = vpack.c.b16 %v91, %v90
  %v95 = vpack.c.b16 %v92, %v92
  %vm98 = vcmask 293888
  %v100 = vsel %vm98, %v75, 0
  %v103 = vsel %vm98, %v76, 0
  %v106 = vsel %vm98, %v77, 0
  %v109 = vsel %vm98, %v78, 0
  %v112 = vsel %vm98, %v79, 0
  %v115 = vsel %vm98, %v80, 0
  %v118 = vsel %vm98, %v81, 0
  %v121 = vsel %vm98, %v82, 0
  %vm123 = vcmask 1041408
  %v125 = vsel %vm123, %v95, 0
  %127 = vmatprep.subr.bf16.mxu0 0
  %128 = vmatpush1.bf16.msra.mxu0 %v93
  %129 = vmatprep.subr.bf16.mxu0 0
  %130 = vmatpush1.bf16.msra.mxu0 %v94
  %131 = vmatprep.subr.bf16.mxu0 0
  %132 = vmatpush1.bf16.msra.mxu0 %v125
  %133 = vmatprep.subr.bf16.mxu0 0
  %134 = vmatpush1.bf16.msra.mxu0 0
  %135 = vmatprep.subr.bf16.mxu0 0
  %136 = vmatpush1.bf16.msra.mxu0 0
  %137 = vmatprep.subr.bf16.mxu0 0
  %138 = vmatpush1.bf16.msra.mxu0 0
  %139 = vmatprep.subr.bf16.mxu0 0
  %140 = vmatpush1.bf16.msra.mxu0 0
  %141 = vmatprep.subr.bf16.mxu0 0
  %142 = vmatpush1.bf16.msra.mxu0 0
  %143 = vmatprep.subr.bf16.mxu0 0
  %144 = vmatpush1.bf16.msra.mxu0 0
  %145 = vmatprep.subr.bf16.mxu0 0
  %146 = vmatpush1.bf16.msra.mxu0 0
  %147 = vmatprep.subr.bf16.mxu0 0
  %148 = vmatpush1.bf16.msra.mxu0 0
  %149 = vmatprep.subr.bf16.mxu0 0
  %150 = vmatpush1.bf16.msra.mxu0 0
  %151 = vmatprep.subr.bf16.mxu0 0
  %152 = vmatpush1.bf16.msra.mxu0 0
  %153 = vmatprep.subr.bf16.mxu0 0
  %154 = vmatpush1.bf16.msra.mxu0 0
  %155 = vmatprep.subr.bf16.mxu0 0
  %156 = vmatpush1.bf16.msra.mxu0 0
  %157 = vmatprep.subr.bf16.mxu0 0
  %158 = vmatpush1.bf16.msra.mxu0 0
  %159 = vmatprep.mubr.bf16.mxu0 0
  %160 = vmatmul.mubr.bf16.gmra.mrb[0].mxu0 %v100
  %v161 = vpop.f32.mrb[0].mxu0
  %v162 = vadd.f32 %v41, %v161
  %v163 = vpop.f32.mrb[0].mxu0
  %v164 = vpop.f32.mrb[0].mxu0
  %v165 = vadd.f32 %v41, %v164
  %v166 = vpop.f32.mrb[0].mxu0
  %167 = vmatprep.mubr.bf16.mxu0 0
  %168 = vmatmul.mubr.bf16.gmra.mrb[0].mxu0 %v103
  %v169 = vpop.f32.mrb[0].mxu0
  %v170 = vadd.f32 %v41, %v169
  %v171 = vpop.f32.mrb[0].mxu0
  %v172 = vpop.f32.mrb[0].mxu0
  %v173 = vadd.f32 %v41, %v172
  %v174 = vpop.f32.mrb[0].mxu0
  %175 = vmatprep.mubr.bf16.mxu0 0
  %176 = vmatmul.mubr.bf16.gmra.mrb[0].mxu0 %v106
  %v177 = vpop.f32.mrb[0].mxu0
  %v178 = vadd.f32 %v41, %v177
  %v179 = vpop.f32.mrb[0].mxu0
  %v180 = vpop.f32.mrb[0].mxu0
  %v181 = vadd.f32 %v41, %v180
  %v182 = vpop.f32.mrb[0].mxu0
  %183 = vmatprep.mubr.bf16.mxu0 0
  %184 = vmatmul.mubr.bf16.gmra.mrb[0].mxu0 %v109
  %v185 = vpop.f32.mrb[0].mxu0
  %v186 = vadd.f32 %v41, %v185
  %v187 = vpop.f32.mrb[0].mxu0
  %v188 = vpop.f32.mrb[0].mxu0
  %v189 = vadd.f32 %v41, %v188
  %v190 = vpop.f32.mrb[0].mxu0
  %191 = vmatprep.mubr.bf16.mxu0 0
  %192 = vmatmul.mubr.bf16.gmra.mrb[0].mxu0 %v112
  %v193 = vpop.f32.mrb[0].mxu0
  %v194 = vadd.f32 %v41, %v193
  %v195 = vpop.f32.mrb[0].mxu0
  %v196 = vpop.f32.mrb[0].mxu0
  %v197 = vadd.f32 %v41, %v196
  %v198 = vpop.f32.mrb[0].mxu0
  %199 = vmatprep.mubr.bf16.mxu0 0
  %200 = vmatmul.mubr.bf16.gmra.mrb[0].mxu0 %v115
  %v201 = vpop.f32.mrb[0].mxu0
  %v202 = vadd.f32 %v41, %v201
  %v203 = vpop.f32.mrb[0].mxu0
  %v204 = vpop.f32.mrb[0].mxu0
  %v205 = vadd.f32 %v41, %v204
  %v206 = vpop.f32.mrb[0].mxu0
  %207 = vmatprep.mubr.bf16.mxu0 0
  %208 = vmatmul.mubr.bf16.gmra.mrb[0].mxu0 %v118
  %v209 = vpop.f32.mrb[0].mxu0
  %v210 = vadd.f32 %v41, %v209
  %v211 = vpop.f32.mrb[0].mxu0
  %v212 = vpop.f32.mrb[0].mxu0
  %v213 = vadd.f32 %v41, %v212
  %v214 = vpop.f32.mrb[0].mxu0
  %215 = vmatprep.mubr.bf16.mxu0 0
  %216 = vmatmul.mubr.bf16.gmra.mrb[0].mxu0 %v121
  %v217 = vpop.f32.mrb[0].mxu0
  %v218 = vadd.f32 %v41, %v217
  %v219 = vpop.f32.mrb[0].mxu0
  %v220 = vpop.f32.mrb[0].mxu0
  %v221 = vadd.f32 %v41, %v220
  %v222 = vpop.f32.mrb[0].mxu0
  %223 = vdwg.mxu0
  %v224 = vmax.f32 %v162, 0.0
  %v225 = vmax.f32 %v165, 0.0
  %v226 = vmax.f32 %v170, 0.0
  %v227 = vmax.f32 %v173, 0.0
  %v228 = vmax.f32 %v178, 0.0
  %v229 = vmax.f32 %v181, 0.0
  %v230 = vmax.f32 %v186, 0.0
  %v231 = vmax.f32 %v189, 0.0
  %v232 = vmax.f32 %v194, 0.0
  %v233 = vmax.f32 %v197, 0.0
  %v234 = vmax.f32 %v202, 0.0
  %v235 = vmax.f32 %v205, 0.0
  %v236 = vmax.f32 %v210, 0.0
  %v237 = vmax.f32 %v213, 0.0
  %v238 = vmax.f32 %v218, 0.0
  %v239 = vmax.f32 %v221, 0.0
  %240 = vst [vmem:[%s3] sm:$0xff] %v224
  %241 = vst [vmem:[%s3 + $0x8] sm:$0xff] %v225
  %242 = vst [vmem:[%s3 + $0x10] sm:$0xff] %v226
  %243 = vst [vmem:[%s3 + $0x18] sm:$0xff] %v227
  %244 = vst [vmem:[%s3 + $0x20] sm:$0xff] %v228
  %245 = vst [vmem:[%s3 + $0x28] sm:$0xff] %v229
  %246 = vst [vmem:[%s3 + $0x30] sm:$0xff] %v230
  %247 = vst [vmem:[%s3 + $0x38] sm:$0xff] %v231
  %248 = vst [vmem:[%s3 + $0x40] sm:$0xff] %v232
  %249 = vst [vmem:[%s3 + $0x48] sm:$0xff] %v233
  %250 = vst [vmem:[%s3 + $0x50] sm:$0xff] %v234
  %251 = vst [vmem:[%s3 + $0x58] sm:$0xff] %v235
  %252 = vst [vmem:[%s3 + $0x60] sm:$0xff] %v236
  %253 = vst [vmem:[%s3 + $0x68] sm:$0xff] %v237
  %254 = vst [vmem:[%s3 + $0x70] sm:$0xff] %v238
  %255 = vst [vmem:[%s3 + $0x78] sm:$0xff] %v239
  // Predicated region
  $region14: #{fsqvae_forward.4} parent=0 // pred_check
    _
  $region15: #{fsqvae_forward.4} parent=0 // pred_check_branch
    %257 = sbr.rel (0) target = $region17
  $region16: #{fsqvae_forward.4} parent=0 // pred_region
    _
  $region17: #{fsqvae_forward.4} parent=0 // pred_fallthru
    _
  // Predicated region
  $region18: #{fsqvae_forward.4} parent=0 // pred_check
    _
  $region19: #{fsqvae_forward.4} parent=0 // pred_check_branch
    %259 = sbr.rel (0) target = $region21
  $region20: #{fsqvae_forward.4} parent=0 // pred_region
    _
  $region21: #{fsqvae_forward.4} parent=0 // pred_fallthru
    _

// kernel: fsqvae_forward.5
$region0: #{fsqvae_forward.5}
  #allocation0 [shape = 'u32[]', space=smem, size = 0x4, offset = 0x4, fixed_abs, tag = 'smem constant byte address 0x4 - core index']
  #allocation1 [shape = 'u32[144,128]{1,0:T(1,128)}', space=vmem, size = 0x12000, scoped, tag = 'internal scratch']
  %s0 = inlined_call_operand.vmem [shape: bf16[32,288], index: 0, kind: input, shape index: {}]
  %s1 = inlined_call_operand.vmem [shape: bf16[288,128], index: 1, kind: input, shape index: {}]
  %s2 = inlined_call_operand.vmem [shape: f32[1,128], index: 2, kind: input, shape index: {}]
  %s3 = inlined_call_operand.vmem [shape: f32[5,128], index: 3, kind: input, shape index: {}]
  %s4 = inlined_call_operand.vmem [shape: f32[32,128], index: 4, kind: output, shape index: {0}]
  %s5 = inlined_call_operand.vmem [shape: s32[32,1], index: 5, kind: output, shape index: {1}]
  %6 = xla_tuple %s4, %s5
  %s7 = sld [smem:[#allocation0]]
  $region34: #{fsqvae_forward.5} parent=0
    _
  %s9 = ssub.s32 1, %s7
  %s10 = scalar_select 0, %s9, %s7
  // Predicated region
  $region2: #{fsqvae_forward.5} parent=0 // pred_check
    _
  $region3: #{fsqvae_forward.5} parent=0 // pred_check_branch
    %12 = sbr.rel (0) target = $region5
  $region4: #{fsqvae_forward.5} parent=0 // pred_region
    _
  $region5: #{fsqvae_forward.5} parent=0 // pred_fallthru
    _
  // Predicated region
  $region6: #{fsqvae_forward.5} parent=0 // pred_check
    _
  $region7: #{fsqvae_forward.5} parent=0 // pred_check_branch
    %14 = sbr.rel (0) target = $region9
  $region8: #{fsqvae_forward.5} parent=0 // pred_region
    _
  $region9: #{fsqvae_forward.5} parent=0 // pred_fallthru
    _
  // Predicated region
  $region10: #{fsqvae_forward.5} parent=0 // pred_check
    _
  $region11: #{fsqvae_forward.5} parent=0 // pred_check_branch
    %16 = sbr.rel (0) target = $region13
  $region12: #{fsqvae_forward.5} parent=0 // pred_region
    _
  $region13: #{fsqvae_forward.5} parent=0 // pred_fallthru
    _
  // Predicated region
  $region14: #{fsqvae_forward.5} parent=0 // pred_check
    _
  $region15: #{fsqvae_forward.5} parent=0 // pred_check_branch
    %18 = sbr.rel (0) target = $region17
  $region16: #{fsqvae_forward.5} parent=0 // pred_region
    _
  $region17: #{fsqvae_forward.5} parent=0 // pred_fallthru
    _
  %v20 = vld [vmem:[%s0] sm:$0xff]
  %v21 = vld [vmem:[%s0 + $0x8] sm:$0xf]
  %v22 = vld [vmem:[%s0 + $0xc] sm:$0xff]
  %v23 = vld [vmem:[%s0 + $0x14] sm:$0xf]
  %v24 = vld [vmem:[%s0 + $0x18] sm:$0xff]
  %v25 = vld [vmem:[%s0 + $0x20] sm:$0xf]
  %v26 = vld [vmem:[%s0 + $0x24] sm:$0xff]
  %v27 = vld [vmem:[%s0 + $0x2c] sm:$0xf]
  %v28 = vld [vmem:[%s1] sm:$0xf]
  %v29 = vld [vmem:[%s1 + $0x4] sm:$0xf]
  %v30 = vld [vmem:[%s1 + $0x8] sm:$0xf]
  %v31 = vld [vmem:[%s1 + $0xc] sm:$0xf]
  %v32 = vld [vmem:[%s1 + $0x10] sm:$0xf]
  %v33 = vld [vmem:[%s1 + $0x14] sm:$0xf]
  %v34 = vld [vmem:[%s1 + $0x18] sm:$0xf]
  %v35 = vld [vmem:[%s1 + $0x1c] sm:$0xf]
  %v36 = vld [vmem:[%s1 + $0x20] sm:$0xf]
  %v37 = vld [vmem:[%s1 + $0x24] sm:$0xf]
  %v38 = vld [vmem:[%s1 + $0x28] sm:$0xf]
  %v39 = vld [vmem:[%s1 + $0x2c] sm:$0xf]
  %v40 = vld [vmem:[%s1 + $0x30] sm:$0xf]
  %v41 = vld [vmem:[%s1 + $0x34] sm:$0xf]
  %v42 = vld [vmem:[%s1 + $0x38] sm:$0xf]
  %v43 = vld [vmem:[%s1 + $0x3c] sm:$0xf]
  %v44 = vld [vmem:[%s1 + $0x40] sm:$0xf]
  %v45 = vld [vmem:[%s1 + $0x44] sm:$0xf]
  %v46 = vld [vmem:[%s1 + $0x48] sm:$0xf]
  %v47 = vld [vmem:[%s1 + $0x4c] sm:$0xf]
  %v48 = vld [vmem:[%s1 + $0x50] sm:$0xf]
  %v49 = vld [vmem:[%s1 + $0x54] sm:$0xf]
  %v50 = vld [vmem:[%s1 + $0x58] sm:$0xf]
  %v51 = vld [vmem:[%s1 + $0x5c] sm:$0xf]
  %v52 = vld [vmem:[%s1 + $0x60] sm:$0xf]
  %v53 = vld [vmem:[%s1 + $0x64] sm:$0xf]
  %v54 = vld [vmem:[%s1 + $0x68] sm:$0xf]
  %v55 = vld [vmem:[%s1 + $0x6c] sm:$0xf]
  %v56 = vld [vmem:[%s1 + $0x70] sm:$0xf]
  %v57 = vld [vmem:[%s1 + $0x74] sm:$0xf]
  %v58 = vld [vmem:[%s1 + $0x78] sm:$0xf]
  %v59 = vld [vmem:[%s1 + $0x7c] sm:$0xf]
  %v60 = vld [vmem:[%s1 + $0x80] sm:$0xf]
  %v61 = vld [vmem:[%s1 + $0x84] sm:$0xf]
  %v62 = vld [vmem:[%s1 + $0x88] sm:$0xf]
  %v63 = vld [vmem:[%s1 + $0x8c] sm:$0xf]
  %v64 = vld [vmem:[%s2] sm:$0x1]
  %v66 = vlaneseq
  %v67 = vshrl.u32 %v66, 7
  %v68 = vsub.s32 0, %v67
  %v69 = vrot.slane %v64, %v68
  %v79 = vunpack.c.l.b16 %v20
  %v80 = vunpack.c.h.b16 %v20
  %v81 = vunpack.c.l.b16 %v21
  %v82 = vunpack.c.l.b16 %v22
  %v83 = vunpack.c.h.b16 %v22
  %v84 = vunpack.c.l.b16 %v23
  %v85 = vunpack.c.l.b16 %v24
  %v86 = vunpack.c.h.b16 %v24
  %v87 = vunpack.c.l.b16 %v25
  %v88 = vunpack.c.l.b16 %v26
  %v89 = vunpack.c.h.b16 %v26
  %v90 = vunpack.c.l.b16 %v27
  %v91 = vpack.c.b16 %v82, %v79
  %v92 = vpack.c.b16 %v83, %v80
  %v93 = vpack.c.b16 %v84, %v81
  %v94 = vpack.c.b16 %v88, %v85
  %v95 = vpack.c.b16 %v89, %v86
  %v96 = vpack.c.b16 %v90, %v87
  %v137 = vunpack.c.l.b16 %v28
  %v138 = vunpack.c.l.b16 %v29
  %v139 = vunpack.c.l.b16 %v30
  %v140 = vunpack.c.l.b16 %v31
  %v141 = vunpack.c.l.b16 %v32
  %v142 = vunpack.c.l.b16 %v33
  %v143 = vunpack.c.l.b16 %v34
  %v144 = vunpack.c.l.b16 %v35
  %v145 = vunpack.c.l.b16 %v36
  %v146 = vunpack.c.l.b16 %v37
  %v147 = vunpack.c.l.b16 %v38
  %v148 = vunpack.c.l.b16 %v39
  %v149 = vunpack.c.l.b16 %v40
  %v150 = vunpack.c.l.b16 %v41
  %v151 = vunpack.c.l.b16 %v42
  %v152 = vunpack.c.l.b16 %v43
  %v153 = vunpack.c.l.b16 %v44
  %v154 = vunpack.c.l.b16 %v45
  %v155 = vunpack.c.l.b16 %v46
  %v156 = vunpack.c.l.b16 %v47
  %v157 = vunpack.c.l.b16 %v48
  %v158 = vunpack.c.l.b16 %v49
  %v159 = vunpack.c.l.b16 %v50
  %v160 = vunpack.c.l.b16 %v51
  %v161 = vunpack.c.l.b16 %v52
  %v162 = vunpack.c.l.b16 %v53
  %v163 = vunpack.c.l.b16 %v54
  %v164 = vunpack.c.l.b16 %v55
  %v165 = vunpack.c.l.b16 %v56
  %v166 = vunpack.c.l.b16 %v57
  %v167 = vunpack.c.l.b16 %v58
  %v168 = vunpack.c.l.b16 %v59
  %v169 = vunpack.c.l.b16 %v60
  %v170 = vunpack.c.l.b16 %v61
  %v171 = vunpack.c.l.b16 %v62
  %v172 = vunpack.c.l.b16 %v63
  %v173 = vpack.c.b16 %v138, %v137
  %v174 = vpack.c.b16 %v140, %v139
  %v175 = vpack.c.b16 %v142, %v141
  %v176 = vpack.c.b16 %v144, %v143
  %v177 = vpack.c.b16 %v146, %v145
  %v178 = vpack.c.b16 %v148, %v147
  %v179 = vpack.c.b16 %v150, %v149
  %v180 = vpack.c.b16 %v152, %v151
  %v181 = vpack.c.b16 %v154, %v153
  %v182 = vpack.c.b16 %v156, %v155
  %v183 = vpack.c.b16 %v158, %v157
  %v184 = vpack.c.b16 %v160, %v159
  %v185 = vpack.c.b16 %v162, %v161
  %v186 = vpack.c.b16 %v164, %v163
  %v187 = vpack.c.b16 %v166, %v165
  %v188 = vpack.c.b16 %v168, %v167
  %v189 = vpack.c.b16 %v170, %v169
  %v190 = vpack.c.b16 %v172, %v171
  %vm209 = vcmask 261120
  %v211 = vsel %vm209, %v93, 0
  %v214 = vsel %vm209, %v96, 0
  %216 = vmatprep.subr.bf16.mxu0 0
  %217 = vmatpush1.bf16.msra.mxu0 %v173
  %218 = vmatprep.subr.bf16.mxu0 0
  %219 = vmatpush1.bf16.msra.mxu0 %v174
  %220 = vmatprep.subr.bf16.mxu0 0
  %221 = vmatpush1.bf16.msra.mxu0 %v175
  %222 = vmatprep.subr.bf16.mxu0 0
  %223 = vmatpush1.bf16.msra.mxu0 %v176
  %224 = vmatprep.subr.bf16.mxu0 0
  %225 = vmatpush1.bf16.msra.mxu0 %v177
  %226 = vmatprep.subr.bf16.mxu0 0
  %227 = vmatpush1.bf16.msra.mxu0 %v178
  %228 = vmatprep.subr.bf16.mxu0 0
  %229 = vmatpush1.bf16.msra.mxu0 %v179
  %230 = vmatprep.subr.bf16.mxu0 0
  %231 = vmatpush1.bf16.msra.mxu0 %v180
  %232 = vmatprep.subr.bf16.mxu0 0
  %233 = vmatpush1.bf16.msra.mxu0 %v181
  %234 = vmatprep.subr.bf16.mxu0 0
  %235 = vmatpush1.bf16.msra.mxu0 %v182
  %236 = vmatprep.subr.bf16.mxu0 0
  %237 = vmatpush1.bf16.msra.mxu0 %v183
  %238 = vmatprep.subr.bf16.mxu0 0
  %239 = vmatpush1.bf16.msra.mxu0 %v184
  %240 = vmatprep.subr.bf16.mxu0 0
  %241 = vmatpush1.bf16.msra.mxu0 %v185
  %242 = vmatprep.subr.bf16.mxu0 0
  %243 = vmatpush1.bf16.msra.mxu0 %v186
  %244 = vmatprep.subr.bf16.mxu0 0
  %245 = vmatpush1.bf16.msra.mxu0 %v187
  %246 = vmatprep.subr.bf16.mxu0 0
  %247 = vmatpush1.bf16.msra.mxu0 %v188
  %248 = vmatprep.mubr.bf16.mxu0 %v92
  %249 = vmatmul.mubr.bf16.gmra.mrb[0].mxu0 %v91
  %v250 = vpop.f32.mrb[0].mxu0
  %v251 = vadd.f32 %v69, %v250
  %v252 = vpop.f32.mrb[0].mxu0
  %v253 = vpop.f32.mrb[0].mxu0
  %v254 = vadd.f32 %v69, %v253
  %v255 = vpop.f32.mrb[0].mxu0
  %256 = vmatprep.mubr.bf16.mxu0 %v95
  %257 = vmatmul.mubr.bf16.gmra.mrb[0].mxu0 %v94
  %v258 = vpop.f32.mrb[0].mxu0
  %v259 = vadd.f32 %v69, %v258
  %v260 = vpop.f32.mrb[0].mxu0
  %v261 = vpop.f32.mrb[0].mxu0
  %v262 = vadd.f32 %v69, %v261
  %v263 = vpop.f32.mrb[0].mxu0
  %264 = vdwg.mxu0
  %265 = vmatprep.subr.bf16.mxu0 0
  %266 = vmatpush1.bf16.msra.mxu0 %v189
  %267 = vmatprep.subr.bf16.mxu0 0
  %268 = vmatpush1.bf16.msra.mxu0 %v190
  %269 = vmatprep.subr.bf16.mxu0 0
  %270 = vmatpush1.bf16.msra.mxu0 0
  %271 = vmatprep.subr.bf16.mxu0 0
  %272 = vmatpush1.bf16.msra.mxu0 0
  %273 = vmatprep.subr.bf16.mxu0 0
  %274 = vmatpush1.bf16.msra.mxu0 0
  %275 = vmatprep.subr.bf16.mxu0 0
  %276 = vmatpush1.bf16.msra.mxu0 0
  %277 = vmatprep.subr.bf16.mxu0 0
  %278 = vmatpush1.bf16.msra.mxu0 0
  %279 = vmatprep.subr.bf16.mxu0 0
  %280 = vmatpush1.bf16.msra.mxu0 0
  %281 = vmatprep.subr.bf16.mxu0 0
  %282 = vmatpush1.bf16.msra.mxu0 0
  %283 = vmatprep.subr.bf16.mxu0 0
  %284 = vmatpush1.bf16.msra.mxu0 0
  %285 = vmatprep.subr.bf16.mxu0 0
  %286 = vmatpush1.bf16.msra.mxu0 0
  %287 = vmatprep.subr.bf16.mxu0 0
  %288 = vmatpush1.bf16.msra.mxu0 0
  %289 = vmatprep.subr.bf16.mxu0 0
  %290 = vmatpush1.bf16.msra.mxu0 0
  %291 = vmatprep.subr.bf16.mxu0 0
  %292 = vmatpush1.bf16.msra.mxu0 0
  %293 = vmatprep.subr.bf16.mxu0 0
  %294 = vmatpush1.bf16.msra.mxu0 0
  %295 = vmatprep.subr.bf16.mxu0 0
  %296 = vmatpush1.bf16.msra.mxu0 0
  %297 = vmatprep.mubr.bf16.mxu0 0
  %298 = vmatmul.mubr.bf16.gmra.mrb[0].mxu0 %v211
  %v299 = vpop.f32.mrb[0].mxu0
  %v300 = vadd.f32 %v251, %v299
  %v301 = vpop.f32.mrb[0].mxu0
  %v302 = vpop.f32.mrb[0].mxu0
  %v303 = vadd.f32 %v254, %v302
  %v304 = vpop.f32.mrb[0].mxu0
  %305 = vmatprep.mubr.bf16.mxu0 0
  %306 = vmatmul.mubr.bf16.gmra.mrb[0].mxu0 %v214
  %v307 = vpop.f32.mrb[0].mxu0
  %v308 = vadd.f32 %v259, %v307
  %v309 = vpop.f32.mrb[0].mxu0
  %v310 = vpop.f32.mrb[0].mxu0
  %v311 = vadd.f32 %v262, %v310
  %v312 = vpop.f32.mrb[0].mxu0
  %313 = vdwg.mxu0
  %v314 = vld [vmem:[%s3] sm:$0x1f]
  %v315 = vlaneseq
  %v316 = vshrl.u32 %v315, 7
  %v317 = vsub.s32 2, %v316
  %v318 = vrot.slane %v314, %v317
  %v319 = vadd.f32 %v300, %v318
  %v320 = vadd.f32 %v303, %v318
  %v321 = vadd.f32 %v308, %v318
  %v322 = vadd.f32 %v311, %v318
  %v323 = vtanh.pop %v319
  %v324 = vtanh.pop %v320
  %v325 = vtanh.pop %v321
  %v326 = vtanh.pop %v322
  %v327 = vlaneseq
  %v328 = vshrl.u32 %v327, 7
  %v329 = vsub.s32 0, %v328
  %v330 = vrot.slane %v314, %v329
  %v331 = vmul.f32 %v323, %v330
  %v332 = vmul.f32 %v324, %v330
  %v333 = vmul.f32 %v325, %v330
  %v334 = vmul.f32 %v326, %v330
  %v335 = vlaneseq
  %v336 = vshrl.u32 %v335, 7
  %v337 = vsub.s32 1, %v336
  %v338 = vrot.slane %v314, %v337
  %v339 = vsub.f32 %v331, %v338
  %v340 = vsub.f32 %v332, %v338
  %v341 = vsub.f32 %v333, %v338
  %v342 = vsub.f32 %v334, %v338
  %v343 = vround.ne.pseudo %v339
  %v344 = vround.ne.pseudo %v340
  %v345 = vround.ne.pseudo %v341
  %v346 = vround.ne.pseudo %v342
  %v347 = vlaneseq
  %v348 = vshrl.u32 %v347, 7
  %v349 = vsub.s32 3, %v348
  %v350 = vrot.slane %v314, %v349
  %v351 = vrcp.pop %v350
  %v352 = vmul.f32 %v343, %v351
  %v353 = vmul.f32 %v344, %v351
  %v354 = vmul.f32 %v345, %v351
  %v355 = vmul.f32 %v346, %v351
  %356 = vst [vmem:[%s4] sm:$0xff] %v352
  %357 = vst [vmem:[%s4 + $0x8] sm:$0xff] %v353
  %358 = vst [vmem:[%s4 + $0x10] sm:$0xff] %v354
  %359 = vst [vmem:[%s4 + $0x18] sm:$0xff] %v355
  %v360 = vadd.f32 %v343, %v350
  %v361 = vadd.f32 %v344, %v350
  %v362 = vadd.f32 %v345, %v350
  %v363 = vadd.f32 %v346, %v350
  %v364 = vlaneseq
  %v365 = vshrl.u32 %v364, 7
  %v366 = vsub.s32 4, %v365
  %v367 = vrot.slane %v314, %v366
  %v368 = vmul.f32 %v360, %v367
  %v369 = vmul.f32 %v361, %v367
  %v370 = vmul.f32 %v362, %v367
  %v371 = vmul.f32 %v363, %v367
  %372 = vadd.xlane.f32.xlu0 %v368
  %v373 = vpop.xlane.xlu0 %372
  %374 = vadd.xlane.f32.xlu0 %v369
  %v375 = vpop.xlane.xlu0 %374
  %376 = vadd.xlane.f32.xlu0 %v370
  %v377 = vpop.xlane.xlu0 %376
  %378 = vadd.xlane.f32.xlu0 %v371
  %v379 = vpop.xlane.xlu0 %378
  %v380 = vcvt.f32.s32.to.zero.pseudo %v373
  %v381 = vcvt.f32.s32.to.zero.pseudo %v375
  %v382 = vcvt.f32.s32.to.zero.pseudo %v377
  %v383 = vcvt.f32.s32.to.zero.pseudo %v379
  %vm384 = vcmask 7168
  %385 = vst.msk [vmem:[%s5] sm:$0xff] %vm384, %v380
  %386 = vst.msk [vmem:[%s5 + $0x8] sm:$0xff] %vm384, %v381
  %387 = vst.msk [vmem:[%s5 + $0x10] sm:$0xff] %vm384, %v382
  %388 = vst.msk [vmem:[%s5 + $0x18] sm:$0xff] %vm384, %v383
  // Predicated region
  $region18: #{fsqvae_forward.5} parent=0 // pred_check
    _
  $region19: #{fsqvae_forward.5} parent=0 // pred_check_branch
    %390 = sbr.rel (0) target = $region21
  $region20: #{fsqvae_forward.5} parent=0 // pred_region
    _
  $region21: #{fsqvae_forward.5} parent=0 // pred_fallthru
    _
  // Predicated region
  $region22: #{fsqvae_forward.5} parent=0 // pred_check
    _
  $region23: #{fsqvae_forward.5} parent=0 // pred_check_branch
    %392 = sbr.rel (0) target = $region25
  $region24: #{fsqvae_forward.5} parent=0 // pred_region
    _
  $region25: #{fsqvae_forward.5} parent=0 // pred_fallthru
    _
  // Predicated region
  $region26: #{fsqvae_forward.5} parent=0 // pred_check
    _
  $region27: #{fsqvae_forward.5} parent=0 // pred_check_branch
    %394 = sbr.rel (0) target = $region29
  $region28: #{fsqvae_forward.5} parent=0 // pred_region
    _
  $region29: #{fsqvae_forward.5} parent=0 // pred_fallthru
    _
  // Predicated region
  $region30: #{fsqvae_forward.5} parent=0 // pred_check
    _
  $region31: #{fsqvae_forward.5} parent=0 // pred_check_branch
    %396 = sbr.rel (0) target = $region33
  $region32: #{fsqvae_forward.5} parent=0 // pred_region
    _
  $region33: #{fsqvae_forward.5} parent=0 // pred_fallthru
    _

// kernel: tile.10
$region0: #{tile.10}
  #allocation0 [shape = 's32[1]{0}', space=sflag, size = 0x4, scoped, tag = 'scoped memory for tile.10']
  %s0 = inlined_call_operand.vmem [shape: f32[32], index: 0, kind: input, shape index: {}]
  %s1 = inlined_call_operand.vmem [shape: f32[4,32], index: 1, kind: output, shape index: {}]
  // Predicated region
  $region2: #{tile.10} parent=0 // pred_check
    _
  $region3: #{tile.10} parent=0 // pred_check_branch
    %3 = sbr.rel (0) target = $region5
  $region4: #{tile.10} parent=0 // pred_region
    _
  $region5: #{tile.10} parent=0 // pred_fallthru
    _
  %v4 = vld [vmem:[%s0] ss:$0 sm:$0xff]
  %5 = vst [vmem:[%s1] sm:$0xf] %v4

// kernel: fsqvae_forward.6
$region0: #{fsqvae_forward.6}
  #allocation0 [shape = 'u32[]', space=smem, size = 0x4, offset = 0x4, fixed_abs, tag = 'smem constant byte address 0x4 - core index']
  #allocation1 [shape = 'u32[144,128]{1,0:T(1,128)}', space=vmem, size = 0x12000, scoped, tag = 'internal scratch']
  %s0 = inlined_call_operand.vmem [shape: bf16[32,45], index: 0, kind: input, shape index: {}]
  %s1 = inlined_call_operand.vmem [shape: bf16[45,128], index: 1, kind: input, shape index: {}]
  %s2 = inlined_call_operand.vmem [shape: f32[1,128], index: 2, kind: input, shape index: {}]
  %s3 = inlined_call_operand.vmem [shape: f32[32,128], index: 3, kind: output, shape index: {}]
  %s4 = sld [smem:[#allocation0]]
  $region22: #{fsqvae_forward.6} parent=0
    _
  %s6 = ssub.s32 1, %s4
  %s7 = scalar_select 0, %s6, %s4
  // Predicated region
  $region2: #{fsqvae_forward.6} parent=0 // pred_check
    _
  $region3: #{fsqvae_forward.6} parent=0 // pred_check_branch
    %9 = sbr.rel (0) target = $region5
  $region4: #{fsqvae_forward.6} parent=0 // pred_region
    _
  $region5: #{fsqvae_forward.6} parent=0 // pred_fallthru
    _
  // Predicated region
  $region6: #{fsqvae_forward.6} parent=0 // pred_check
    _
  $region7: #{fsqvae_forward.6} parent=0 // pred_check_branch
    %11 = sbr.rel (0) target = $region9
  $region8: #{fsqvae_forward.6} parent=0 // pred_region
    _
  $region9: #{fsqvae_forward.6} parent=0 // pred_fallthru
    _
  // Predicated region
  $region10: #{fsqvae_forward.6} parent=0 // pred_check
    _
  $region11: #{fsqvae_forward.6} parent=0 // pred_check_branch
    %13 = sbr.rel (0) target = $region13
  $region12: #{fsqvae_forward.6} parent=0 // pred_region
    _
  $region13: #{fsqvae_forward.6} parent=0 // pred_fallthru
    _
  %v15 = vld [vmem:[%s0] sm:$0xf]
  %v16 = vld [vmem:[%s0 + $0x4] sm:$0xf]
  %v17 = vld [vmem:[%s0 + $0x8] sm:$0xf]
  %v18 = vld [vmem:[%s0 + $0xc] sm:$0xf]
  %v19 = vld [vmem:[%s1] sm:$0xf]
  %v20 = vld [vmem:[%s1 + $0x4] sm:$0xf]
  %v21 = vld [vmem:[%s1 + $0x8] sm:$0xf]
  %v22 = vld [vmem:[%s1 + $0xc] sm:$0xf]
  %v23 = vld [vmem:[%s1 + $0x10] sm:$0xf]
  %v24 = vld [vmem:[%s1 + $0x14] sm:$0x7]
  %v25 = vld [vmem:[%s2] sm:$0x1]
  %v27 = vlaneseq
  %v28 = vshrl.u32 %v27, 7
  %v29 = vsub.s32 0, %v28
  %v30 = vrot.slane %v25, %v29
  %v36 = vunpack.c.l.b16 %v15
  %v37 = vunpack.c.l.b16 %v16
  %v38 = vunpack.c.l.b16 %v17
  %v39 = vunpack.c.l.b16 %v18
  %v40 = vpack.c.b16 %v37, %v36
  %v41 = vpack.c.b16 %v39, %v38
  %v48 = vunpack.c.l.b16 %v19
  %v49 = vunpack.c.l.b16 %v20
  %v50 = vunpack.c.l.b16 %v21
  %v51 = vunpack.c.l.b16 %v22
  %v52 = vunpack.c.l.b16 %v23
  %v53 = vunpack.c.l.b16 %v24
  %v54 = vpack.c.b16 %v49, %v48
  %v55 = vpack.c.b16 %v51, %v50
  %v56 = vpack.c.b16 %v53, %v52
  %vm59 = vcmask 367616
  %v61 = vsel %vm59, %v40, 0
  %v64 = vsel %vm59, %v41, 0
  %vm66 = vcmask 1045504
  %vm67 = vcmask 1046528
  %v68 = vsel %vm66, 4294967295, 65535
  %v69 = vsel %vm67, %v68, 0
  %v71 = vand.u32 %v56, %v69
  %73 = vmatprep.subr.bf16.mxu0 0
  %74 = vmatpush1.bf16.msra.mxu0 %v54
  %75 = vmatprep.subr.bf16.mxu0 0
  %76 = vmatpush1.bf16.msra.mxu0 %v55
  %77 = vmatprep.subr.bf16.mxu0 0
  %78 = vmatpush1.bf16.msra.mxu0 %v71
  %79 = vmatprep.subr.bf16.mxu0 0
  %80 = vmatpush1.bf16.msra.mxu0 0
  %81 = vmatprep.subr.bf16.mxu0 0
  %82 = vmatpush1.bf16.msra.mxu0 0
  %83 = vmatprep.subr.bf16.mxu0 0
  %84 = vmatpush1.bf16.msra.mxu0 0
  %85 = vmatprep.subr.bf16.mxu0 0
  %86 = vmatpush1.bf16.msra.mxu0 0
  %87 = vmatprep.subr.bf16.mxu0 0
  %88 = vmatpush1.bf16.msra.mxu0 0
  %89 = vmatprep.subr.bf16.mxu0 0
  %90 = vmatpush1.bf16.msra.mxu0 0
  %91 = vmatprep.subr.bf16.mxu0 0
  %92 = vmatpush1.bf16.msra.mxu0 0
  %93 = vmatprep.subr.bf16.mxu0 0
  %94 = vmatpush1.bf16.msra.mxu0 0
  %95 = vmatprep.subr.bf16.mxu0 0
  %96 = vmatpush1.bf16.msra.mxu0 0
  %97 = vmatprep.subr.bf16.mxu0 0
  %98 = vmatpush1.bf16.msra.mxu0 0
  %99 = vmatprep.subr.bf16.mxu0 0
  %100 = vmatpush1.bf16.msra.mxu0 0
  %101 = vmatprep.subr.bf16.mxu0 0
  %102 = vmatpush1.bf16.msra.mxu0 0
  %103 = vmatprep.subr.bf16.mxu0 0
  %104 = vmatpush1.bf16.msra.mxu0 0
  %105 = vmatprep.mubr.bf16.mxu0 0
  %106 = vmatmul.mubr.bf16.gmra.mrb[0].mxu0 %v61
  %v107 = vpop.f32.mrb[0].mxu0
  %v108 = vadd.f32 %v30, %v107
  %v109 = vpop.f32.mrb[0].mxu0
  %v110 = vpop.f32.mrb[0].mxu0
  %v111 = vadd.f32 %v30, %v110
  %v112 = vpop.f32.mrb[0].mxu0
  %113 = vmatprep.mubr.bf16.mxu0 0
  %114 = vmatmul.mubr.bf16.gmra.mrb[0].mxu0 %v64
  %v115 = vpop.f32.mrb[0].mxu0
  %v116 = vadd.f32 %v30, %v115
  %v117 = vpop.f32.mrb[0].mxu0
  %v118 = vpop.f32.mrb[0].mxu0
  %v119 = vadd.f32 %v30, %v118
  %v120 = vpop.f32.mrb[0].mxu0
  %121 = vdwg.mxu0
  %v122 = vmax.f32 %v108, 0.0
  %v123 = vmax.f32 %v111, 0.0
  %v124 = vmax.f32 %v116, 0.0
  %v125 = vmax.f32 %v119, 0.0
  %126 = vst [vmem:[%s3] sm:$0xff] %v122
  %127 = vst [vmem:[%s3 + $0x8] sm:$0xff] %v123
  %128 = vst [vmem:[%s3 + $0x10] sm:$0xff] %v124
  %129 = vst [vmem:[%s3 + $0x18] sm:$0xff] %v125
  // Predicated region
  $region14: #{fsqvae_forward.6} parent=0 // pred_check
    _
  $region15: #{fsqvae_forward.6} parent=0 // pred_check_branch
    %131 = sbr.rel (0) target = $region17
  $region16: #{fsqvae_forward.6} parent=0 // pred_region
    _
  $region17: #{fsqvae_forward.6} parent=0 // pred_fallthru
    _
  // Predicated region
  $region18: #{fsqvae_forward.6} parent=0 // pred_check
    _
  $region19: #{fsqvae_forward.6} parent=0 // pred_check_branch
    %133 = sbr.rel (0) target = $region21
  $region20: #{fsqvae_forward.6} parent=0 // pred_region
    _
  $region21: #{fsqvae_forward.6} parent=0 // pred_fallthru
    _

// kernel: squeeze.1
$region0: #{squeeze.1}
  %s0 = inlined_call_operand.vmem [shape: s32[32], index: 0, kind: input, shape index: {}]
  %s1 = inlined_call_operand.hbm [shape: s32[2,4,4], index: 1, kind: output, shape index: {}]
  $region1: #{squeeze.1} parent=0
    #allocation0 [shape = 'u8[4096]{0}', space=vmem, size = 0x1000, scoped, tag = 'operand span for operand 1']
    #allocation1 [shape = 's32[1]{0}', space=sflag, size = 0x4, scoped, tag = 'scoped memory for squeeze.1']
    #allocation2 [shape = 'u8[8192]{0}', space=vmem, size = 0x2000, scoped, tag = 'scoped mem for output reshape']
    #allocation3 [shape = 'u8[4096]{0}', space=vmem, size = 0x1000, scoped, tag = 'scoped mem for input reshape']
    %2 = vsyncpa [#allocation1], 0
    %s4 = sshllo.u32 0, 1
    %v5 = vld [vmem:[%s0] sm:%s4]
    %6 = vst [vmem:[#allocation3] sm:%s4] %v5
    %v7 = vld [vmem:[#allocation3] sm:$0x1]
    %vm8 = vcmask 31744
    %9 = vst.msk [vmem:[#allocation2] sm:$0x1] %vm8, %v7
    %v10 = vld [vmem:[#allocation3] sm:$0x1]
    %11 = vrot.lane.b32.xlu0 %v10, 124
    %v12 = vpop.permute.xlu0 %11
    %vm13 = vcmask 31744
    %s14 = scalar_lea.vmem [#allocation2], 1
    %15 = vst.msk [vmem:[%s14] sm:$0x1] %vm13, %v12
    %v16 = vld [vmem:[#allocation3] sm:$0x1]
    %17 = vrot.lane.b32.xlu0 %v16, 120
    %v18 = vpop.permute.xlu0 %17
    %vm19 = vcmask 31744
    %s20 = scalar_lea.vmem [#allocation2], 2
    %21 = vst.msk [vmem:[%s20] sm:$0x1] %vm19, %v18
    %v22 = vld [vmem:[#allocation3] sm:$0x1]
    %23 = vrot.lane.b32.xlu0 %v22, 116
    %v24 = vpop.permute.xlu0 %23
    %vm25 = vcmask 31744
    %s26 = scalar_lea.vmem [#allocation2], 3
    %27 = vst.msk [vmem:[%s26] sm:$0x1] %vm25, %v24
    %v28 = vld [vmem:[#allocation3] sm:$0x1]
    %29 = vrot.lane.b32.xlu0 %v28, 112
    %v30 = vpop.permute.xlu0 %29
    %vm31 = vcmask 31744
    %s32 = scalar_lea.vmem [#allocation2], 8
    %33 = vst.msk [vmem:[%s32] sm:$0x1] %vm31, %v30
    %v34 = vld [vmem:[#allocation3] sm:$0x1]
    %35 = vrot.lane.b32.xlu0 %v34, 108
    %v36 = vpop.permute.xlu0 %35
    %vm37 = vcmask 31744
    %s38 = scalar_lea.vmem [#allocation2], 9
    %39 = vst.msk [vmem:[%s38] sm:$0x1] %vm37, %v36
    %v40 = vld [vmem:[#allocation3] sm:$0x1]
    %41 = vrot.lane.b32.xlu0 %v40, 104
    %v42 = vpop.permute.xlu0 %41
    %vm43 = vcmask 31744
    %s44 = scalar_lea.vmem [#allocation2], 10
    %45 = vst.msk [vmem:[%s44] sm:$0x1] %vm43, %v42
    %v46 = vld [vmem:[#allocation3] sm:$0x1]
    %47 = vrot.lane.b32.xlu0 %v46, 100
    %v48 = vpop.permute.xlu0 %47
    %vm49 = vcmask 31744
    %s50 = scalar_lea.vmem [#allocation2], 11
    %51 = vst.msk [vmem:[%s50] sm:$0x1] %vm49, %v48
    %s53 = sshllo.u32 0, 4
    %v55 = vld [vmem:[#allocation2] sm:%s53]
    %s56 = sshllo.u32 0, 4
    %57 = vst [vmem:[#allocation0] sm:%s56] %v55
    %s58 = scalar_lea.vmem [#allocation2], 8
    %v59 = vld [vmem:[%s58] sm:%s53]
    %s60 = sshllo.u32 0, 4
    %s61 = scalar_lea.vmem [#allocation0], 4
    %62 = vst [vmem:[%s61] sm:%s60] %v59
    %s64 = ssub.s32 128, 128
    %65 = vsyncadd [#allocation1], %s64
    %s67 = sshll.u32 [#allocation0], 4
    %s68 = int_to_ptr.vmem [resolvable:$true] %s67
    %70 = dma.vmem_to_hbm [thread:$0]  %s68, 128, %s1, [#allocation1]
    %71 = dma.done [#allocation1], 128
    %72 = vsyncpa [#allocation1], 1

// kernel: fsqvae_forward.7
$region0: #{fsqvae_forward.7}
  #allocation0 [shape = 'u32[]', space=smem, size = 0x4, offset = 0x4, fixed_abs, tag = 'smem constant byte address 0x4 - core index']
  #allocation1 [shape = 'u32[144,128]{1,0:T(1,128)}', space=vmem, size = 0x12000, scoped, tag = 'internal scratch']
  %s0 = inlined_call_operand.vmem [shape: bf16[128,288], index: 0, kind: input, shape index: {}]
  %s1 = inlined_call_operand.vmem [shape: bf16[288,128], index: 1, kind: input, shape index: {}]
  %s2 = inlined_call_operand.vmem [shape: f32[1,128], index: 2, kind: input, shape index: {}]
  %s3 = inlined_call_operand.vmem [shape: f32[128,128], index: 3, kind: output, shape index: {}]
  %s4 = sld [smem:[#allocation0]]
  $region22: #{fsqvae_forward.7} parent=0
    _
  %s6 = ssub.s32 1, %s4
  %s7 = scalar_select 0, %s6, %s4
  // Predicated region
  $region2: #{fsqvae_forward.7} parent=0 // pred_check
    _
  $region3: #{fsqvae_forward.7} parent=0 // pred_check_branch
    %9 = sbr.rel (0) target = $region5
  $region4: #{fsqvae_forward.7} parent=0 // pred_region
    _
  $region5: #{fsqvae_forward.7} parent=0 // pred_fallthru
    _
  // Predicated region
  $region6: #{fsqvae_forward.7} parent=0 // pred_check
    _
  $region7: #{fsqvae_forward.7} parent=0 // pred_check_branch
    %11 = sbr.rel (0) target = $region9
  $region8: #{fsqvae_forward.7} parent=0 // pred_region
    _
  $region9: #{fsqvae_forward.7} parent=0 // pred_fallthru
    _
  // Predicated region
  $region10: #{fsqvae_forward.7} parent=0 // pred_check
    _
  $region11: #{fsqvae_forward.7} parent=0 // pred_check_branch
    %13 = sbr.rel (0) target = $region13
  $region12: #{fsqvae_forward.7} parent=0 // pred_region
    _
  $region13: #{fsqvae_forward.7} parent=0 // pred_fallthru
    _
  %v15 = vld [vmem:[%s0] sm:$0xff]
  %v16 = vld [vmem:[%s0 + $0x8] sm:$0xf]
  %v17 = vld [vmem:[%s0 + $0xc] sm:$0xff]
  %v18 = vld [vmem:[%s0 + $0x14] sm:$0xf]
  %v19 = vld [vmem:[%s0 + $0x18] sm:$0xff]
  %v20 = vld [vmem:[%s0 + $0x20] sm:$0xf]
  %v21 = vld [vmem:[%s0 + $0x24] sm:$0xff]
  %v22 = vld [vmem:[%s0 + $0x2c] sm:$0xf]
  %v23 = vld [vmem:[%s0 + $0x30] sm:$0xff]
  %v24 = vld [vmem:[%s0 + $0x38] sm:$0xf]
  %v25 = vld [vmem:[%s0 + $0x3c] sm:$0xff]
  %v26 = vld [vmem:[%s0 + $0x44] sm:$0xf]
  %v27 = vld [vmem:[%s0 + $0x48] sm:$0xff]
  %v28 = vld [vmem:[%s0 + $0x50] sm:$0xf]
  %v29 = vld [vmem:[%s0 + $0x54] sm:$0xff]
  %v30 = vld [vmem:[%s0 + $0x5c] sm:$0xf]
  %v31 = vld [vmem:[%s0 + $0x60] sm:$0xff]
  %v32 = vld [vmem:[%s0 + $0x68] sm:$0xf]
  %v33 = vld [vmem:[%s0 + $0x6c] sm:$0xff]
  %v34 = vld [vmem:[%s0 + $0x74] sm:$0xf]
  %v35 = vld [vmem:[%s0 + $0x78] sm:$0xff]
  %v36 = vld [vmem:[%s0 + $0x80] sm:$0xf]
  %v37 = vld [vmem:[%s0 + $0x84] sm:$0xff]
  %v38 = vld [vmem:[%s0 + $0x8c] sm:$0xf]
  %v39 = vld [vmem:[%s0 + $0x90] sm:$0xff]
  %v40 = vld [vmem:[%s0 + $0x98] sm:$0xf]
  %v41 = vld [vmem:[%s0 + $0x9c] sm:$0xff]
  %v42 = vld [vmem:[%s0 + $0xa4] sm:$0xf]
  %v43 = vld [vmem:[%s0 + $0xa8] sm:$0xff]
  %v44 = vld [vmem:[%s0 + $0xb0] sm:$0xf]
  %v45 = vld [vmem:[%s0 + $0xb4] sm:$0xff]
  %v46 = vld [vmem:[%s0 + $0xbc] sm:$0xf]
  %v47 = vld [vmem:[%s1] sm:$0xf]
  %v48 = vld [vmem:[%s1 + $0x4] sm:$0xf]
  %v49 = vld [vmem:[%s1 + $0x8] sm:$0xf]
  %v50 = vld [vmem:[%s1 + $0xc] sm:$0xf]
  %v51 = vld [vmem:[%s1 + $0x10] sm:$0xf]
  %v52 = vld [vmem:[%s1 + $0x14] sm:$0xf]
  %v53 = vld [vmem:[%s1 + $0x18] sm:$0xf]
  %v54 = vld [vmem:[%s1 + $0x1c] sm:$0xf]
  %v55 = vld [vmem:[%s1 + $0x20] sm:$0xf]
  %v56 = vld [vmem:[%s1 + $0x24] sm:$0xf]
  %v57 = vld [vmem:[%s1 + $0x28] sm:$0xf]
  %v58 = vld [vmem:[%s1 + $0x2c] sm:$0xf]
  %v59 = vld [vmem:[%s1 + $0x30] sm:$0xf]
  %v60 = vld [vmem:[%s1 + $0x34] sm:$0xf]
  %v61 = vld [vmem:[%s1 + $0x38] sm:$0xf]
  %v62 = vld [vmem:[%s1 + $0x3c] sm:$0xf]
  %v63 = vld [vmem:[%s1 + $0x40] sm:$0xf]
  %v64 = vld [vmem:[%s1 + $0x44] sm:$0xf]
  %v65 = vld [vmem:[%s1 + $0x48] sm:$0xf]
  %v66 = vld [vmem:[%s1 + $0x4c] sm:$0xf]
  %v67 = vld [vmem:[%s1 + $0x50] sm:$0xf]
  %v68 = vld [vmem:[%s1 + $0x54] sm:$0xf]
  %v69 = vld [vmem:[%s1 + $0x58] sm:$0xf]
  %v70 = vld [vmem:[%s1 + $0x5c] sm:$0xf]
  %v71 = vld [vmem:[%s1 + $0x60] sm:$0xf]
  %v72 = vld [vmem:[%s1 + $0x64] sm:$0xf]
  %v73 = vld [vmem:[%s1 + $0x68] sm:$0xf]
  %v74 = vld [vmem:[%s1 + $0x6c] sm:$0xf]
  %v75 = vld [vmem:[%s1 + $0x70] sm:$0xf]
  %v76 = vld [vmem:[%s1 + $0x74] sm:$0xf]
  %v77 = vld [vmem:[%s1 + $0x78] sm:$0xf]
  %v78 = vld [vmem:[%s1 + $0x7c] sm:$0xf]
  %v79 = vld [vmem:[%s1 + $0x80] sm:$0xf]
  %v80 = vld [vmem:[%s1 + $0x84] sm:$0xf]
  %v81 = vld [vmem:[%s1 + $0x88] sm:$0xf]
  %v82 = vld [vmem:[%s1 + $0x8c] sm:$0xf]
  %v83 = vld [vmem:[%s2] sm:$0x1]
  %v85 = vlaneseq
  %v86 = vshrl.u32 %v85, 7
  %v87 = vsub.s32 0, %v86
  %v88 = vrot.slane %v83, %v87
  %v122 = vunpack.c.l.b16 %v15
  %v123 = vunpack.c.h.b16 %v15
  %v124 = vunpack.c.l.b16 %v16
  %v125 = vunpack.c.l.b16 %v17
  %v126 = vunpack.c.h.b16 %v17
  %v127 = vunpack.c.l.b16 %v18
  %v128 = vunpack.c.l.b16 %v19
  %v129 = vunpack.c.h.b16 %v19
  %v130 = vunpack.c.l.b16 %v20
  %v131 = vunpack.c.l.b16 %v21
  %v132 = vunpack.c.h.b16 %v21
  %v133 = vunpack.c.l.b16 %v22
  %v134 = vunpack.c.l.b16 %v23
  %v135 = vunpack.c.h.b16 %v23
  %v136 = vunpack.c.l.b16 %v24
  %v137 = vunpack.c.l.b16 %v25
  %v138 = vunpack.c.h.b16 %v25
  %v139 = vunpack.c.l.b16 %v26
  %v140 = vunpack.c.l.b16 %v27
  %v141 = vunpack.c.h.b16 %v27
  %v142 = vunpack.c.l.b16 %v28
  %v143 = vunpack.c.l.b16 %v29
  %v144 = vunpack.c.h.b16 %v29
  %v145 = vunpack.c.l.b16 %v30
  %v146 = vunpack.c.l.b16 %v31
  %v147 = vunpack.c.h.b16 %v31
  %v148 = vunpack.c.l.b16 %v32
  %v149 = vunpack.c.l.b16 %v33
  %v150 = vunpack.c.h.b16 %v33
  %v151 = vunpack.c.l.b16 %v34
  %v152 = vunpack.c.l.b16 %v35
  %v153 = vunpack.c.h.b16 %v35
  %v154 = vunpack.c.l.b16 %v36
  %v155 = vunpack.c.l.b16 %v37
  %v156 = vunpack.c.h.b16 %v37
  %v157 = vunpack.c.l.b16 %v38
  %v158 = vunpack.c.l.b16 %v39
  %v159 = vunpack.c.h.b16 %v39
  %v160 = vunpack.c.l.b16 %v40
  %v161 = vunpack.c.l.b16 %v41
  %v162 = vunpack.c.h.b16 %v41
  %v163 = vunpack.c.l.b16 %v42
  %v164 = vunpack.c.l.b16 %v43
  %v165 = vunpack.c.h.b16 %v43
  %v166 = vunpack.c.l.b16 %v44
  %v167 = vunpack.c.l.b16 %v45
  %v168 = vunpack.c.h.b16 %v45
  %v169 = vunpack.c.l.b16 %v46
  %v170 = vpack.c.b16 %v125, %v122
  %v171 = vpack.c.b16 %v126, %v123
  %v172 = vpack.c.b16 %v127, %v124
  %v173 = vpack.c.b16 %v131, %v128
  %v174 = vpack.c.b16 %v132, %v129
  %v175 = vpack.c.b16 %v133, %v130
  %v176 = vpack.c.b16 %v137, %v134
  %v177 = vpack.c.b16 %v138, %v135
  %v178 = vpack.c.b16 %v139, %v136
  %v179 = vpack.c.b16 %v143, %v140
  %v180 = vpack.c.b16 %v144, %v141
  %v181 = vpack.c.b16 %v145, %v142
  %v182 = vpack.c.b16 %v149, %v146
  %v183 = vpack.c.b16 %v150, %v147
  %v184 = vpack.c.b16 %v151, %v148
  %v185 = vpack.c.b16 %v155, %v152
  %v186 = vpack.c.b16 %v156, %v153
  %v187 = vpack.c.b16 %v157, %v154
  %v188 = vpack.c.b16 %v161, %v158
  %v189 = vpack.c.b16 %v162, %v159
  %v190 = vpack.c.b16 %v163, %v160
  %v191 = vpack.c.b16 %v167, %v164
  %v192 = vpack.c.b16 %v168, %v165
  %v193 = vpack.c.b16 %v169, %v166
  %v246 = vunpack.c.l.b16 %v47
  %v247 = vunpack.c.l.b16 %v48
  %v248 = vunpack.c.l.b16 %v49
  %v249 = vunpack.c.l.b16 %v50
  %v250 = vunpack.c.l.b16 %v51
  %v251 = vunpack.c.l.b16 %v52
  %v252 = vunpack.c.l.b16 %v53
  %v253 = vunpack.c.l.b16 %v54
  %v254 = vunpack.c.l.b16 %v55
  %v255 = vunpack.c.l.b16 %v56
  %v256 = vunpack.c.l.b16 %v57
  %v257 = vunpack.c.l.b16 %v58
  %v258 = vunpack.c.l.b16 %v59
  %v259 = vunpack.c.l.b16 %v60
  %v260 = vunpack.c.l.b16 %v61
  %v261 = vunpack.c.l.b16 %v62
  %v262 = vunpack.c.l.b16 %v63
  %v263 = vunpack.c.l.b16 %v64
  %v264 = vunpack.c.l.b16 %v65
  %v265 = vunpack.c.l.b16 %v66
  %v266 = vunpack.c.l.b16 %v67
  %v267 = vunpack.c.l.b16 %v68
  %v268 = vunpack.c.l.b16 %v69
  %v269 = vunpack.c.l.b16 %v70
  %v270 = vunpack.c.l.b16 %v71
  %v271 = vunpack.c.l.b16 %v72
  %v272 = vunpack.c.l.b16 %v73
  %v273 = vunpack.c.l.b16 %v74
  %v274 = vunpack.c.l.b16 %v75
  %v275 = vunpack.c.l.b16 %v76
  %v276 = vunpack.c.l.b16 %v77
  %v277 = vunpack.c.l.b16 %v78
  %v278 = vunpack.c.l.b16 %v79
  %v279 = vunpack.c.l.b16 %v80
  %v280 = vunpack.c.l.b16 %v81
  %v281 = vunpack.c.l.b16 %v82
  %v282 = vpack.c.b16 %v247, %v246
  %v283 = vpack.c.b16 %v249, %v248
  %v284 = vpack.c.b16 %v251, %v250
  %v285 = vpack.c.b16 %v253, %v252
  %v286 = vpack.c.b16 %v255, %v254
  %v287 = vpack.c.b16 %v257, %v256
  %v288 = vpack.c.b16 %v259, %v258
  %v289 = vpack.c.b16 %v261, %v260
  %v290 = vpack.c.b16 %v263, %v262
  %v291 = vpack.c.b16 %v265, %v264
  %v292 = vpack.c.b16 %v267, %v266
  %v293 = vpack.c.b16 %v269, %v268
  %v294 = vpack.c.b16 %v271, %v270
  %v295 = vpack.c.b16 %v273, %v272
  %v296 = vpack.c.b16 %v275, %v274
  %v297 = vpack.c.b16 %v277, %v276
  %v298 = vpack.c.b16 %v279, %v278
  %v299 = vpack.c.b16 %v281, %v280
  %vm318 = vcmask 261120
  %v320 = vsel %vm318, %v172, 0
  %v323 = vsel %vm318, %v175, 0
  %v326 = vsel %vm318, %v178, 0
  %v329 = vsel %vm318, %v181, 0
  %v332 = vsel %vm318, %v184, 0
  %v335 = vsel %vm318, %v187, 0
  %v338 = vsel %vm318, %v190, 0
  %v341 = vsel %vm318, %v193, 0
  %343 = vmatprep.subr.bf16.mxu0 0
  %344 = vmatpush1.bf16.msra.mxu0 %v282
  %345 = vmatprep.subr.bf16.mxu0 0
  %346 = vmatpush1.bf16.msra.mxu0 %v283
  %347 = vmatprep.subr.bf16.mxu0 0
  %348 = vmatpush1.bf16.msra.mxu0 %v284
  %349 = vmatprep.subr.bf16.mxu0 0
  %350 = vmatpush1.bf16.msra.mxu0 %v285
  %351 = vmatprep.subr.bf16.mxu0 0
  %352 = vmatpush1.bf16.msra.mxu0 %v286
  %353 = vmatprep.subr.bf16.mxu0 0
  %354 = vmatpush1.bf16.msra.mxu0 %v287
  %355 = vmatprep.subr.bf16.mxu0 0
  %356 = vmatpush1.bf16.msra.mxu0 %v288
  %357 = vmatprep.subr.bf16.mxu0 0
  %358 = vmatpush1.bf16.msra.mxu0 %v289
  %359 = vmatprep.subr.bf16.mxu0 0
  %360 = vmatpush1.bf16.msra.mxu0 %v290
  %361 = vmatprep.subr.bf16.mxu0 0
  %362 = vmatpush1.bf16.msra.mxu0 %v291
  %363 = vmatprep.subr.bf16.mxu0 0
  %364 = vmatpush1.bf16.msra.mxu0 %v292
  %365 = vmatprep.subr.bf16.mxu0 0
  %366 = vmatpush1.bf16.msra.mxu0 %v293
  %367 = vmatprep.subr.bf16.mxu0 0
  %368 = vmatpush1.bf16.msra.mxu0 %v294
  %369 = vmatprep.subr.bf16.mxu0 0
  %370 = vmatpush1.bf16.msra.mxu0 %v295
  %371 = vmatprep.subr.bf16.mxu0 0
  %372 = vmatpush1.bf16.msra.mxu0 %v296
  %373 = vmatprep.subr.bf16.mxu0 0
  %374 = vmatpush1.bf16.msra.mxu0 %v297
  %375 = vmatprep.mubr.bf16.mxu0 %v171
  %376 = vmatmul.mubr.bf16.gmra.mrb[0].mxu0 %v170
  %v377 = vpop.f32.mrb[0].mxu0
  %v378 = vadd.f32 %v88, %v377
  %v379 = vpop.f32.mrb[0].mxu0
  %v380 = vpop.f32.mrb[0].mxu0
  %v381 = vadd.f32 %v88, %v380
  %v382 = vpop.f32.mrb[0].mxu0
  %383 = vmatprep.mubr.bf16.mxu0 %v174
  %384 = vmatmul.mubr.bf16.gmra.mrb[0].mxu0 %v173
  %v385 = vpop.f32.mrb[0].mxu0
  %v386 = vadd.f32 %v88, %v385
  %v387 = vpop.f32.mrb[0].mxu0
  %v388 = vpop.f32.mrb[0].mxu0
  %v389 = vadd.f32 %v88, %v388
  %v390 = vpop.f32.mrb[0].mxu0
  %391 = vmatprep.mubr.bf16.mxu0 %v177
  %392 = vmatmul.mubr.bf16.gmra.mrb[0].mxu0 %v176
  %v393 = vpop.f32.mrb[0].mxu0
  %v394 = vadd.f32 %v88, %v393
  %v395 = vpop.f32.mrb[0].mxu0
  %v396 = vpop.f32.mrb[0].mxu0
  %v397 = vadd.f32 %v88, %v396
  %v398 = vpop.f32.mrb[0].mxu0
  %399 = vmatprep.mubr.bf16.mxu0 %v180
  %400 = vmatmul.mubr.bf16.gmra.mrb[0].mxu0 %v179
  %v401 = vpop.f32.mrb[0].mxu0
  %v402 = vadd.f32 %v88, %v401
  %v403 = vpop.f32.mrb[0].mxu0
  %v404 = vpop.f32.mrb[0].mxu0
  %v405 = vadd.f32 %v88, %v404
  %v406 = vpop.f32.mrb[0].mxu0
  %407 = vmatprep.mubr.bf16.mxu0 %v183
  %408 = vmatmul.mubr.bf16.gmra.mrb[0].mxu0 %v182
  %v409 = vpop.f32.mrb[0].mxu0
  %v410 = vadd.f32 %v88, %v409
  %v411 = vpop.f32.mrb[0].mxu0
  %v412 = vpop.f32.mrb[0].mxu0
  %v413 = vadd.f32 %v88, %v412
  %v414 = vpop.f32.mrb[0].mxu0
  %415 = vmatprep.mubr.bf16.mxu0 %v186
  %416 = vmatmul.mubr.bf16.gmra.mrb[0].mxu0 %v185
  %v417 = vpop.f32.mrb[0].mxu0
  %v418 = vadd.f32 %v88, %v417
  %v419 = vpop.f32.mrb[0].mxu0
  %v420 = vpop.f32.mrb[0].mxu0
  %v421 = vadd.f32 %v88, %v420
  %v422 = vpop.f32.mrb[0].mxu0
  %423 = vmatprep.mubr.bf16.mxu0 %v189
  %424 = vmatmul.mubr.bf16.gmra.mrb[0].mxu0 %v188
  %v425 = vpop.f32.mrb[0].mxu0
  %v426 = vadd.f32 %v88, %v425
  %v427 = vpop.f32.mrb[0].mxu0
  %v428 = vpop.f32.mrb[0].mxu0
  %v429 = vadd.f32 %v88, %v428
  %v430 = vpop.f32.mrb[0].mxu0
  %431 = vmatprep.mubr.bf16.mxu0 %v192
  %432 = vmatmul.mubr.bf16.gmra.mrb[0].mxu0 %v191
  %v433 = vpop.f32.mrb[0].mxu0
  %v434 = vadd.f32 %v88, %v433
  %v435 = vpop.f32.mrb[0].mxu0
  %v436 = vpop.f32.mrb[0].mxu0
  %v437 = vadd.f32 %v88, %v436
  %v438 = vpop.f32.mrb[0].mxu0
  %439 = vdwg.mxu0
  %440 = vmatprep.subr.bf16.mxu0 0
  %441 = vmatpush1.bf16.msra.mxu0 %v298
  %442 = vmatprep.subr.bf16.mxu0 0
  %443 = vmatpush1.bf16.msra.mxu0 %v299
  %444 = vmatprep.subr.bf16.mxu0 0
  %445 = vmatpush1.bf16.msra.mxu0 0
  %446 = vmatprep.subr.bf16.mxu0 0
  %447 = vmatpush1.bf16.msra.mxu0 0
  %448 = vmatprep.subr.bf16.mxu0 0
  %449 = vmatpush1.bf16.msra.mxu0 0
  %450 = vmatprep.subr.bf16.mxu0 0
  %451 = vmatpush1.bf16.msra.mxu0 0
  %452 = vmatprep.subr.bf16.mxu0 0
  %453 = vmatpush1.bf16.msra.mxu0 0
  %454 = vmatprep.subr.bf16.mxu0 0
  %455 = vmatpush1.bf16.msra.mxu0 0
  %456 = vmatprep.subr.bf16.mxu0 0
  %457 = vmatpush1.bf16.msra.mxu0 0
  %458 = vmatprep.subr.bf16.mxu0 0
  %459 = vmatpush1.bf16.msra.mxu0 0
  %460 = vmatprep.subr.bf16.mxu0 0
  %461 = vmatpush1.bf16.msra.mxu0 0
  %462 = vmatprep.subr.bf16.mxu0 0
  %463 = vmatpush1.bf16.msra.mxu0 0
  %464 = vmatprep.subr.bf16.mxu0 0
  %465 = vmatpush1.bf16.msra.mxu0 0
  %466 = vmatprep.subr.bf16.mxu0 0
  %467 = vmatpush1.bf16.msra.mxu0 0
  %468 = vmatprep.subr.bf16.mxu0 0
  %469 = vmatpush1.bf16.msra.mxu0 0
  %470 = vmatprep.subr.bf16.mxu0 0
  %471 = vmatpush1.bf16.msra.mxu0 0
  %472 = vmatprep.mubr.bf16.mxu0 0
  %473 = vmatmul.mubr.bf16.gmra.mrb[0].mxu0 %v320
  %v474 = vpop.f32.mrb[0].mxu0
  %v475 = vadd.f32 %v378, %v474
  %v476 = vpop.f32.mrb[0].mxu0
  %v477 = vpop.f32.mrb[0].mxu0
  %v478 = vadd.f32 %v381, %v477
  %v479 = vpop.f32.mrb[0].mxu0
  %480 = vmatprep.mubr.bf16.mxu0 0
  %481 = vmatmul.mubr.bf16.gmra.mrb[0].mxu0 %v323
  %v482 = vpop.f32.mrb[0].mxu0
  %v483 = vadd.f32 %v386, %v482
  %v484 = vpop.f32.mrb[0].mxu0
  %v485 = vpop.f32.mrb[0].mxu0
  %v486 = vadd.f32 %v389, %v485
  %v487 = vpop.f32.mrb[0].mxu0
  %488 = vmatprep.mubr.bf16.mxu0 0
  %489 = vmatmul.mubr.bf16.gmra.mrb[0].mxu0 %v326
  %v490 = vpop.f32.mrb[0].mxu0
  %v491 = vadd.f32 %v394, %v490
  %v492 = vpop.f32.mrb[0].mxu0
  %v493 = vpop.f32.mrb[0].mxu0
  %v494 = vadd.f32 %v397, %v493
  %v495 = vpop.f32.mrb[0].mxu0
  %496 = vmatprep.mubr.bf16.mxu0 0
  %497 = vmatmul.mubr.bf16.gmra.mrb[0].mxu0 %v329
  %v498 = vpop.f32.mrb[0].mxu0
  %v499 = vadd.f32 %v402, %v498
  %v500 = vpop.f32.mrb[0].mxu0
  %v501 = vpop.f32.mrb[0].mxu0
  %v502 = vadd.f32 %v405, %v501
  %v503 = vpop.f32.mrb[0].mxu0
  %504 = vmatprep.mubr.bf16.mxu0 0
  %505 = vmatmul.mubr.bf16.gmra.mrb[0].mxu0 %v332
  %v506 = vpop.f32.mrb[0].mxu0
  %v507 = vadd.f32 %v410, %v506
  %v508 = vpop.f32.mrb[0].mxu0
  %v509 = vpop.f32.mrb[0].mxu0
  %v510 = vadd.f32 %v413, %v509
  %v511 = vpop.f32.mrb[0].mxu0
  %512 = vmatprep.mubr.bf16.mxu0 0
  %513 = vmatmul.mubr.bf16.gmra.mrb[0].mxu0 %v335
  %v514 = vpop.f32.mrb[0].mxu0
  %v515 = vadd.f32 %v418, %v514
  %v516 = vpop.f32.mrb[0].mxu0
  %v517 = vpop.f32.mrb[0].mxu0
  %v518 = vadd.f32 %v421, %v517
  %v519 = vpop.f32.mrb[0].mxu0
  %520 = vmatprep.mubr.bf16.mxu0 0
  %521 = vmatmul.mubr.bf16.gmra.mrb[0].mxu0 %v338
  %v522 = vpop.f32.mrb[0].mxu0
  %v523 = vadd.f32 %v426, %v522
  %v524 = vpop.f32.mrb[0].mxu0
  %v525 = vpop.f32.mrb[0].mxu0
  %v526 = vadd.f32 %v429, %v525
  %v527 = vpop.f32.mrb[0].mxu0
  %528 = vmatprep.mubr.bf16.mxu0 0
  %529 = vmatmul.mubr.bf16.gmra.mrb[0].mxu0 %v341
  %v530 = vpop.f32.mrb[0].mxu0
  %v531 = vadd.f32 %v434, %v530
  %v532 = vpop.f32.mrb[0].mxu0
  %v533 = vpop.f32.mrb[0].mxu0
  %v534 = vadd.f32 %v437, %v533
  %v535 = vpop.f32.mrb[0].mxu0
  %536 = vdwg.mxu0
  %537 = vst [vmem:[%s3] sm:$0xff] %v475
  %538 = vst [vmem:[%s3 + $0x8] sm:$0xff] %v478
  %539 = vst [vmem:[%s3 + $0x10] sm:$0xff] %v483
  %540 = vst [vmem:[%s3 + $0x18] sm:$0xff] %v486
  %541 = vst [vmem:[%s3 + $0x20] sm:$0xff] %v491
  %542 = vst [vmem:[%s3 + $0x28] sm:$0xff] %v494
  %543 = vst [vmem:[%s3 + $0x30] sm:$0xff] %v499
  %544 = vst [vmem:[%s3 + $0x38] sm:$0xff] %v502
  %545 = vst [vmem:[%s3 + $0x40] sm:$0xff] %v507
  %546 = vst [vmem:[%s3 + $0x48] sm:$0xff] %v510
  %547 = vst [vmem:[%s3 + $0x50] sm:$0xff] %v515
  %548 = vst [vmem:[%s3 + $0x58] sm:$0xff] %v518
  %549 = vst [vmem:[%s3 + $0x60] sm:$0xff] %v523
  %550 = vst [vmem:[%s3 + $0x68] sm:$0xff] %v526
  %551 = vst [vmem:[%s3 + $0x70] sm:$0xff] %v531
  %552 = vst [vmem:[%s3 + $0x78] sm:$0xff] %v534
  // Predicated region
  $region14: #{fsqvae_forward.7} parent=0 // pred_check
    _
  $region15: #{fsqvae_forward.7} parent=0 // pred_check_branch
    %554 = sbr.rel (0) target = $region17
  $region16: #{fsqvae_forward.7} parent=0 // pred_region
    _
  $region17: #{fsqvae_forward.7} parent=0 // pred_fallthru
    _
  // Predicated region
  $region18: #{fsqvae_forward.7} parent=0 // pred_check
    _
  $region19: #{fsqvae_forward.7} parent=0 // pred_check_branch
    %556 = sbr.rel (0) target = $region21
  $region20: #{fsqvae_forward.7} parent=0 // pred_region
    _
  $region21: #{fsqvae_forward.7} parent=0 // pred_fallthru
    _

</llo_original>
